<compile_context>
chip_gen: v7x
topology: tpu7x:2x2x1
jax: 0.10.0
libtpu: 0.0.40
codegen_flags: <defaults>
</compile_context>

<pallas_src>
import jax
import jax.numpy as jnp
import numpy as np
from jax import lax
from jax.experimental import pallas as pl
from jax.experimental.pallas import tpu as pltpu


# ---------------------------------------------------------------------------
# Fused kernel: maxpool+conv1+BN+SiLU  ||  conv2+BN+SiLU -> conv3+BN+SiLU
# ---------------------------------------------------------------------------
def _mpconv_fused_kernel(x_ref, w1_ref, b1_ref,
                         w2_ref, b2_ref,
                         w3_ref, b3_ref,
                         o_ref, y2a_scr):
    """Whole MPConvLayer for one batch element.

    x_ref  : (1, 4, Ho, Wo, Cin) phase-separated input (phase p=2a+b holds
             x[2r+a, 2c+b, :]).
    w1_ref : (Cin, mid)   1x1 conv weights (BN scale pre-folded), branch 1
    w2_ref : (Cin, mid)   1x1 conv weights (BN scale pre-folded), branch 2
    w3_ref : (9*mid, mid) 3x3 conv weights (BN scale pre-folded), rows (dy,dx,ci)
    b*_ref : (1, mid) folded-BN bias (f32)
    o_ref  : (1, Ho, Wo, 2*mid) NHWC output, channels = [conv branch, pool branch]
    y2a_scr: (4, Ho+1, Wo+1, mid) zero-padded phase planes of the branch-2
             1x1-conv output; row/col 0 provide conv3's zero padding.
    """
    _, _, Ho, Wo, Cin = x_ref.shape
    mid = w1_ref.shape[-1]

    x = x_ref[0]                                   # (4, Ho, Wo, Cin)

    # --- branch 1: 2x2/s2 max-pool + 1x1 conv + BN + SiLU -------------------
    xm = jnp.max(x, axis=0)                        # (Ho, Wo, Cin)  pool = max of 4 phases
    h1 = jnp.dot(xm.reshape(Ho * Wo, Cin), w1_ref[...],
                 preferred_element_type=jnp.float32) + b1_ref[...]
    y1 = h1 * jax.nn.sigmoid(h1)                   # (Ho*Wo, mid) f32

    # --- branch 2a: 1x1 conv + BN + SiLU on all 4 phases at once ------------
    h2 = jnp.dot(x.reshape(4 * Ho * Wo, Cin), w2_ref[...],
                 preferred_element_type=jnp.float32) + b2_ref[...]
    y2a = (h2 * jax.nn.sigmoid(h2)).astype(y2a_scr.dtype)

    # Scatter into the zero-padded phase scratch:
    #   S[p, i, j] = y2a_phase_p[i-1, j-1],  S[p, 0, :] = S[p, :, 0] = 0
    y2a_scr[...] = jnp.zeros_like(y2a_scr)
    y2a_scr[:, 1:, 1:, :] = y2a.reshape(4, Ho, Wo, mid)

    # --- branch 2b: 3x3/s2 conv (pad=1) as ONE big-K matmul -----------------
    # Tap (dy, dx) reads y2a_full[2R+dy-1, 2C+dx-1]:
    #   dy=0 -> row phase a=1, scratch rows [0:Ho]   (row 0 is the zero pad)
    #   dy=1 -> row phase a=0, scratch rows [1:Ho+1]
    #   dy=2 -> row phase a=1, scratch rows [1:Ho+1]
    # identically for columns with phase b / start offset j0.
    sel = ((1, 0), (0, 1), (1, 1))                 # (parity, start offset)
    taps = []
    for dy in range(3):
        a, i0 = sel[dy]
        for dx in range(3):
            b, j0 = sel[dx]
            taps.append(y2a_scr[2 * a + b, i0:i0 + Ho, j0:j0 + Wo, :])
    patches = jnp.concatenate(taps, axis=-1)       # (Ho, Wo, 9*mid) im2col in VMEM
    h3 = jnp.dot(patches.reshape(Ho * Wo, 9 * mid), w3_ref[...],
                 preferred_element_type=jnp.float32) + b3_ref[...]
    y2 = h3 * jax.nn.sigmoid(h3)                   # (Ho*Wo, mid) f32

    # --- concat [conv branch, pool branch] -> single lane-dense NHWC store --
    out = jnp.concatenate([y2.reshape(Ho, Wo, mid),
                           y1.reshape(Ho, Wo, mid)], axis=-1)
    o_ref[0] = out.astype(o_ref.dtype)


# ---------------------------------------------------------------------------
# Wrapper (NCHW in / NCHW out, matching the PyTorch module)
# ---------------------------------------------------------------------------
def mpconv_layer_pallas(x_nchw, p1, p2, p3, *, compute_dtype=jnp.float32):
    """MPConvLayer forward. x_nchw: (B, Cin, H, W) -> (B, 2*mid, H/2, W/2)."""
    B, Cin, H, W = x_nchw.shape
    assert H % 2 == 0 and W % 2 == 0, "MPConvLayer requires even spatial dims"
    Ho, Wo = H // 2, W // 2
    mid = p1["w"].shape[-1]

    # NCHW -> phase-separated NHWC (one XLA transpose, replacing the plain
    # NCHW->NHWC transpose): x_ph[b, 2a+c, r, s, ci] = x[b, ci, 2r+a, 2s+c].
    x_ph = x_nchw.reshape(B, Cin, Ho, 2, Wo, 2)
    x_ph = jnp.transpose(x_ph, (0, 3, 5, 2, 4, 1)).reshape(B, 4, Ho, Wo, Cin)
    x_ph = x_ph.astype(compute_dtype)

    # Fold the BN scale into the conv weight columns (f32), then cast for MXU.
    w1 = (p1["w"].reshape(Cin, mid) * p1["scale"][None, :]).astype(compute_dtype)
    w2 = (p2["w"].reshape(Cin, mid) * p2["scale"][None, :]).astype(compute_dtype)
    w3 = (p3["w"].reshape(9 * mid, mid) * p3["scale"][None, :]).astype(compute_dtype)
    b1 = p1["bias"].reshape(1, mid).astype(jnp.float32)
    b2 = p2["bias"].reshape(1, mid).astype(jnp.float32)
    b3 = p3["bias"].reshape(1, mid).astype(jnp.float32)

    vspec = pl.BlockSpec((1, mid), lambda i: (0, 0))
    y = pl.pallas_call(
        _mpconv_fused_kernel,
        out_shape=jax.ShapeDtypeStruct((B, Ho, Wo, 2 * mid), jnp.float32),
        grid=(B,),
        in_specs=[
            pl.BlockSpec((1, 4, Ho, Wo, Cin), lambda i: (i, 0, 0, 0, 0)),
            pl.BlockSpec((Cin, mid), lambda i: (0, 0)), vspec,
            pl.BlockSpec((Cin, mid), lambda i: (0, 0)), vspec,
            pl.BlockSpec((9 * mid, mid), lambda i: (0, 0)), vspec,
        ],
        out_specs=pl.BlockSpec((1, Ho, Wo, 2 * mid), lambda i: (i, 0, 0, 0)),
        scratch_shapes=[pltpu.VMEM((4, Ho + 1, Wo + 1, mid), compute_dtype)],
        compiler_params=pltpu.CompilerParams(
            dimension_semantics=("parallel",),          # batch steps -> megacore on v7x
            vmem_limit_bytes=48 * 1024 * 1024),         # > scoped default, < v7x physical
    )(x_ph, w1, b1, w2, b2, w3, b3)

    return jnp.transpose(y, (0, 3, 1, 2))               # NHWC -> NCHW (output only)


# ---------------------------------------------------------------------------
# Parameters (folded BN) and pure-JAX reference
# ---------------------------------------------------------------------------
def make_baseconv_params(key, cin, cout, k, eps=1e-3):
    kw, kg, kb, km, kv = jax.random.split(key, 5)
    w = 0.1 * jax.random.normal(kw, (k * k, cin, cout), jnp.float32)  # HWIO flat
    gamma = 1.0 + 0.1 * jax.random.normal(kg, (cout,), jnp.float32)
    beta = 0.1 * jax.random.normal(kb, (cout,), jnp.float32)
    mean = 0.1 * jax.random.normal(km, (cout,), jnp.float32)
    var = jax.random.uniform(kv, (cout,), jnp.float32, minval=0.5, maxval=1.5)
    scale = gamma / jnp.sqrt(var + eps)
    bias = beta - mean * scale
    return dict(w=w, scale=scale, bias=bias, k=k)


def _base_conv_ref(x, w_flat, scale, bias, k, stride, pad):
    cin, cout = w_flat.shape[1], w_flat.shape[2]
    w = w_flat.reshape(k, k, cin, cout)
    y = lax.conv_general_dilated(
        x, w, (stride, stride), [(pad, pad), (pad, pad)],
        dimension_numbers=("NHWC", "HWIO", "NHWC"))
    y = y * scale.reshape(1, 1, 1, -1) + bias.reshape(1, 1, 1, -1)
    return y * jax.nn.sigmoid(y)


def mpconv_ref(x_nchw, p1, p2, p3):
    x = jnp.transpose(x_nchw, (0, 2, 3, 1))
    B, H, W, C = x.shape
    xm = x.reshape(B, H // 2, 2, W // 2, 2, C).max(axis=(2, 4))
    x1 = _base_conv_ref(xm, p1["w"], p1["scale"], p1["bias"], 1, 1, 0)
    x2 = _base_conv_ref(x, p2["w"], p2["scale"], p2["bias"], 1, 1, 0)
    x2 = _base_conv_ref(x2, p3["w"], p3["scale"], p3["bias"], 3, 2, 1)
    return jnp.transpose(jnp.concatenate([x2, x1], axis=-1), (0, 3, 1, 2))


# ---------------------------------------------------------------------------
if __name__ == "__main__":
    key = jax.random.PRNGKey(0)
    kx, k1, k2, k3 = jax.random.split(key, 4)

    B, Cin, H, W = 2, 4, 16, 16
    out_channels = 4
    mid = int(out_channels * 0.5)   # expansion = 0.5 -> mid = 2

    x = jax.random.normal(kx, (B, Cin, H, W), jnp.float32)
    p1 = make_baseconv_params(k1, Cin, mid, 1)   # conv1: 1x1 on pooled input
    p2 = make_baseconv_params(k2, Cin, mid, 1)   # conv2: 1x1 stride 1
    p3 = make_baseconv_params(k3, mid, mid, 3)   # conv3: 3x3 stride 2 pad 1

    ref = mpconv_ref(x, p1, p2, p3)

    # f32 compute path: tight correctness check.
    out = jax.block_until_ready(
        mpconv_layer_pallas(x, p1, p2, p3, compute_dtype=jnp.float32))
    assert out.shape == (B, 2 * mid, H // 2, W // 2), out.shape
    np.testing.assert_allclose(np.asarray(out), np.asarray(ref),
                               rtol=1e-3, atol=1e-3)

    # bf16 MXU-feed path (the perf configuration on v6e/v7x): looser check,
    # since the reference is pure f32.
    out_bf16 = jax.block_until_ready(
        mpconv_layer_pallas(x, p1, p2, p3, compute_dtype=jnp.bfloat16))
    np.testing.assert_allclose(np.asarray(out_bf16), np.asarray(ref),
                               rtol=5e-2, atol=5e-2)

    print("KERNEL_OK")
</pallas_src>

<mosaic_0001>
module attributes {stable_mosaic.version = 11 : i64} {
  func.func @_mpconv_fused_kernel(%arg0: i32, %arg1: memref<1x4x8x8x4xf32, #tpu.memory_space<vmem>>, %arg2: memref<4x2xf32, #tpu.memory_space<vmem>>, %arg3: memref<1x2xf32, #tpu.memory_space<vmem>>, %arg4: memref<4x2xf32, #tpu.memory_space<vmem>>, %arg5: memref<1x2xf32, #tpu.memory_space<vmem>>, %arg6: memref<18x2xf32, #tpu.memory_space<vmem>>, %arg7: memref<1x2xf32, #tpu.memory_space<vmem>>, %arg8: memref<1x8x8x4xf32, #tpu.memory_space<vmem>>, %arg9: memref<4x9x9x2xf32, #tpu.memory_space<vmem>>) attributes {dimension_semantics = [#tpu.dimension_semantics<parallel>], iteration_bounds = array<i64: 2>, scalar_prefetch = 0 : i64, scratch_operands = 1 : i64, tpu.core_type = #tpu.core_type<tc>, window_params = [{transform_indices = @transform_0, window_bounds = array<i64: 1, 4, 8, 8, 4>}, {pipeline_mode = #tpu.pipeline_mode<synchronous>, transform_indices = @transform_1, window_bounds = array<i64: 4, 2>}, {pipeline_mode = #tpu.pipeline_mode<synchronous>, transform_indices = @transform_2, window_bounds = array<i64: 1, 2>}, {pipeline_mode = #tpu.pipeline_mode<synchronous>, transform_indices = @transform_3, window_bounds = array<i64: 4, 2>}, {pipeline_mode = #tpu.pipeline_mode<synchronous>, transform_indices = @transform_4, window_bounds = array<i64: 1, 2>}, {pipeline_mode = #tpu.pipeline_mode<synchronous>, transform_indices = @transform_5, window_bounds = array<i64: 18, 2>}, {pipeline_mode = #tpu.pipeline_mode<synchronous>, transform_indices = @transform_6, window_bounds = array<i64: 1, 2>}, {transform_indices = @transform_7, window_bounds = array<i64: 1, 8, 8, 4>}]} {
    %c0 = arith.constant 0 : index
    %c0_0 = arith.constant 0 : index
    %c0_1 = arith.constant 0 : index
    %c0_2 = arith.constant 0 : index
    %c0_3 = arith.constant 0 : index
    %0 = vector.load %arg1[%c0, %c0_0, %c0_1, %c0_2, %c0_3] : memref<1x4x8x8x4xf32, #tpu.memory_space<vmem>>, vector<1x4x8x8x4xf32>
    %1 = vector.shape_cast %0 : vector<1x4x8x8x4xf32> to vector<4x8x8x4xf32>
    %cst = arith.constant dense<0xFF800000> : vector<8x8x4xf32>
    %2 = vector.multi_reduction <maximumf>, %1, %cst [0] : vector<4x8x8x4xf32> to vector<8x8x4xf32>
    %3 = vector.shape_cast %2 : vector<8x8x4xf32> to vector<64x4xf32>
    %c0_4 = arith.constant 0 : index
    %c0_5 = arith.constant 0 : index
    %4 = vector.load %arg2[%c0_4, %c0_5] : memref<4x2xf32, #tpu.memory_space<vmem>>, vector<4x2xf32>
    %cst_6 = arith.constant dense<0.000000e+00> : vector<64x2xf32>
    %5 = tpu.matmul %3, %4, %cst_6 {dimension_numbers = #tpu.dot_dimension_numbers<[1], [0], [0], [1], [0, 0, 1, 1], [], []>} : vector<64x4xf32>, vector<4x2xf32>, vector<64x2xf32> -> vector<64x2xf32>
    %c0_7 = arith.constant 0 : index
    %c0_8 = arith.constant 0 : index
    %6 = vector.load %arg3[%c0_7, %c0_8] : memref<1x2xf32, #tpu.memory_space<vmem>>, vector<1x2xf32>
    %7 = vector.broadcast %6 : vector<1x2xf32> to vector<64x2xf32>
    %8 = arith.addf %5, %7 : vector<64x2xf32>
    %9 = arith.negf %8 : vector<64x2xf32>
    %10 = math.exp %9 : vector<64x2xf32>
    %cst_9 = arith.constant 1.000000e+00 : f32
    %11 = vector.broadcast %cst_9 : f32 to vector<64x2xf32>
    %12 = arith.addf %11, %10 : vector<64x2xf32>
    %13 = arith.divf %11, %12 : vector<64x2xf32>
    %14 = arith.mulf %8, %13 : vector<64x2xf32>
    %15 = vector.shape_cast %1 : vector<4x8x8x4xf32> to vector<256x4xf32>
    %c0_10 = arith.constant 0 : index
    %c0_11 = arith.constant 0 : index
    %16 = vector.load %arg4[%c0_10, %c0_11] : memref<4x2xf32, #tpu.memory_space<vmem>>, vector<4x2xf32>
    %cst_12 = arith.constant dense<0.000000e+00> : vector<256x2xf32>
    %17 = tpu.matmul %15, %16, %cst_12 {dimension_numbers = #tpu.dot_dimension_numbers<[1], [0], [0], [1], [0, 0, 1, 1], [], []>} : vector<256x4xf32>, vector<4x2xf32>, vector<256x2xf32> -> vector<256x2xf32>
    %c0_13 = arith.constant 0 : index
    %c0_14 = arith.constant 0 : index
    %18 = vector.load %arg5[%c0_13, %c0_14] : memref<1x2xf32, #tpu.memory_space<vmem>>, vector<1x2xf32>
    %19 = vector.broadcast %18 : vector<1x2xf32> to vector<256x2xf32>
    %20 = arith.addf %17, %19 : vector<256x2xf32>
    %21 = arith.negf %20 : vector<256x2xf32>
    %22 = math.exp %21 : vector<256x2xf32>
    %cst_15 = arith.constant 1.000000e+00 : f32
    %23 = vector.broadcast %cst_15 : f32 to vector<256x2xf32>
    %24 = arith.addf %23, %22 : vector<256x2xf32>
    %25 = arith.divf %23, %24 : vector<256x2xf32>
    %26 = arith.mulf %20, %25 : vector<256x2xf32>
    %cst_16 = arith.constant 0.000000e+00 : f32
    %27 = vector.broadcast %cst_16 : f32 to vector<4x9x9x2xf32>
    %c0_17 = arith.constant 0 : index
    %c0_18 = arith.constant 0 : index
    %c0_19 = arith.constant 0 : index
    %c0_20 = arith.constant 0 : index
    %28 = vector.load %arg9[%c0_17, %c0_18, %c0_19, %c0_20] : memref<4x9x9x2xf32, #tpu.memory_space<vmem>>, vector<4x9x9x2xf32>
    tpu.vector_store %arg9[%c0_17, %c0_18, %c0_19, %c0_20], %27 {strides = array<i32>} : memref<4x9x9x2xf32, #tpu.memory_space<vmem>>, vector<4x9x9x2xf32>,
    %29 = vector.shape_cast %26 : vector<256x2xf32> to vector<4x8x8x2xf32>
    %c0_21 = arith.constant 0 : index
    %c1 = arith.constant 1 : index
    %c1_22 = arith.constant 1 : index
    %c0_23 = arith.constant 0 : index
    %30 = vector.load %arg9[%c0_21, %c1, %c1_22, %c0_23] : memref<4x9x9x2xf32, #tpu.memory_space<vmem>>, vector<4x8x8x2xf32>
    tpu.vector_store %arg9[%c0_21, %c1, %c1_22, %c0_23], %29 {strides = array<i32>} : memref<4x9x9x2xf32, #tpu.memory_space<vmem>>, vector<4x8x8x2xf32>,
    %c3 = arith.constant 3 : index
    %c0_24 = arith.constant 0 : index
    %c0_25 = arith.constant 0 : index
    %c0_26 = arith.constant 0 : index
    %31 = vector.load %arg9[%c3, %c0_24, %c0_25, %c0_26] : memref<4x9x9x2xf32, #tpu.memory_space<vmem>>, vector<1x8x8x2xf32>
    %32 = vector.shape_cast %31 : vector<1x8x8x2xf32> to vector<8x8x2xf32>
    %c2 = arith.constant 2 : index
    %c0_27 = arith.constant 0 : index
    %c1_28 = arith.constant 1 : index
    %c0_29 = arith.constant 0 : index
    %33 = vector.load %arg9[%c2, %c0_27, %c1_28, %c0_29] : memref<4x9x9x2xf32, #tpu.memory_space<vmem>>, vector<1x8x8x2xf32>
    %34 = vector.shape_cast %33 : vector<1x8x8x2xf32> to vector<8x8x2xf32>
    %c3_30 = arith.constant 3 : index
    %c0_31 = arith.constant 0 : index
    %c1_32 = arith.constant 1 : index
    %c0_33 = arith.constant 0 : index
    %35 = vector.load %arg9[%c3_30, %c0_31, %c1_32, %c0_33] : memref<4x9x9x2xf32, #tpu.memory_space<vmem>>, vector<1x8x8x2xf32>
    %36 = vector.shape_cast %35 : vector<1x8x8x2xf32> to vector<8x8x2xf32>
    %c1_34 = arith.constant 1 : index
    %c1_35 = arith.constant 1 : index
    %c0_36 = arith.constant 0 : index
    %c0_37 = arith.constant 0 : index
    %37 = vector.load %arg9[%c1_34, %c1_35, %c0_36, %c0_37] : memref<4x9x9x2xf32, #tpu.memory_space<vmem>>, vector<1x8x8x2xf32>
    %38 = vector.shape_cast %37 : vector<1x8x8x2xf32> to vector<8x8x2xf32>
    %c0_38 = arith.constant 0 : index
    %c1_39 = arith.constant 1 : index
    %c1_40 = arith.constant 1 : index
    %c0_41 = arith.constant 0 : index
    %39 = vector.load %arg9[%c0_38, %c1_39, %c1_40, %c0_41] : memref<4x9x9x2xf32, #tpu.memory_space<vmem>>, vector<1x8x8x2xf32>
    %40 = vector.shape_cast %39 : vector<1x8x8x2xf32> to vector<8x8x2xf32>
    %c1_42 = arith.constant 1 : index
    %c1_43 = arith.constant 1 : index
    %c1_44 = arith.constant 1 : index
    %c0_45 = arith.constant 0 : index
    %41 = vector.load %arg9[%c1_42, %c1_43, %c1_44, %c0_45] : memref<4x9x9x2xf32, #tpu.memory_space<vmem>>, vector<1x8x8x2xf32>
    %42 = vector.shape_cast %41 : vector<1x8x8x2xf32> to vector<8x8x2xf32>
    %c3_46 = arith.constant 3 : index
    %c1_47 = arith.constant 1 : index
    %c0_48 = arith.constant 0 : index
    %c0_49 = arith.constant 0 : index
    %43 = vector.load %arg9[%c3_46, %c1_47, %c0_48, %c0_49] : memref<4x9x9x2xf32, #tpu.memory_space<vmem>>, vector<1x8x8x2xf32>
    %44 = vector.shape_cast %43 : vector<1x8x8x2xf32> to vector<8x8x2xf32>
    %c2_50 = arith.constant 2 : index
    %c1_51 = arith.constant 1 : index
    %c1_52 = arith.constant 1 : index
    %c0_53 = arith.constant 0 : index
    %45 = vector.load %arg9[%c2_50, %c1_51, %c1_52, %c0_53] : memref<4x9x9x2xf32, #tpu.memory_space<vmem>>, vector<1x8x8x2xf32>
    %46 = vector.shape_cast %45 : vector<1x8x8x2xf32> to vector<8x8x2xf32>
    %c3_54 = arith.constant 3 : index
    %c1_55 = arith.constant 1 : index
    %c1_56 = arith.constant 1 : index
    %c0_57 = arith.constant 0 : index
    %47 = vector.load %arg9[%c3_54, %c1_55, %c1_56, %c0_57] : memref<4x9x9x2xf32, #tpu.memory_space<vmem>>, vector<1x8x8x2xf32>
    %48 = vector.shape_cast %47 : vector<1x8x8x2xf32> to vector<8x8x2xf32>
    %49 = tpu.concatenate %32, %34, %36, %38, %40, %42, %44, %46, %48 in 2 : vector<8x8x2xf32>, vector<8x8x2xf32>, vector<8x8x2xf32>, vector<8x8x2xf32>, vector<8x8x2xf32>, vector<8x8x2xf32>, vector<8x8x2xf32>, vector<8x8x2xf32>, vector<8x8x2xf32> -> vector<8x8x18xf32>
    %50 = vector.shape_cast %49 : vector<8x8x18xf32> to vector<64x18xf32>
    %c0_58 = arith.constant 0 : index
    %c0_59 = arith.constant 0 : index
    %51 = vector.load %arg6[%c0_58, %c0_59] : memref<18x2xf32, #tpu.memory_space<vmem>>, vector<18x2xf32>
    %cst_60 = arith.constant dense<0.000000e+00> : vector<64x2xf32>
    %52 = tpu.matmul %50, %51, %cst_60 {dimension_numbers = #tpu.dot_dimension_numbers<[1], [0], [0], [1], [0, 0, 1, 1], [], []>} : vector<64x18xf32>, vector<18x2xf32>, vector<64x2xf32> -> vector<64x2xf32>
    %c0_61 = arith.constant 0 : index
    %c0_62 = arith.constant 0 : index
    %53 = vector.load %arg7[%c0_61, %c0_62] : memref<1x2xf32, #tpu.memory_space<vmem>>, vector<1x2xf32>
    %54 = vector.broadcast %53 : vector<1x2xf32> to vector<64x2xf32>
    %55 = arith.addf %52, %54 : vector<64x2xf32>
    %56 = arith.negf %55 : vector<64x2xf32>
    %57 = math.exp %56 : vector<64x2xf32>
    %cst_63 = arith.constant 1.000000e+00 : f32
    %58 = vector.broadcast %cst_63 : f32 to vector<64x2xf32>
    %59 = arith.addf %58, %57 : vector<64x2xf32>
    %60 = arith.divf %58, %59 : vector<64x2xf32>
    %61 = arith.mulf %55, %60 : vector<64x2xf32>
    %62 = vector.shape_cast %61 : vector<64x2xf32> to vector<8x8x2xf32>
    %63 = vector.shape_cast %14 : vector<64x2xf32> to vector<8x8x2xf32>
    %64 = tpu.concatenate %62, %63 in 2 : vector<8x8x2xf32>, vector<8x8x2xf32> -> vector<8x8x4xf32>
    %c0_64 = arith.constant 0 : index
    %c0_65 = arith.constant 0 : index
    %c0_66 = arith.constant 0 : index
    %c0_67 = arith.constant 0 : index
    %65 = vector.load %arg8[%c0_64, %c0_65, %c0_66, %c0_67] : memref<1x8x8x4xf32, #tpu.memory_space<vmem>>, vector<1x8x8x4xf32>
    %66 = vector.shape_cast %65 : vector<1x8x8x4xf32> to vector<8x8x4xf32>
    %67 = vector.shape_cast %64 : vector<8x8x4xf32> to vector<1x8x8x4xf32>
    tpu.vector_store %arg8[%c0_64, %c0_65, %c0_66, %c0_67], %67 {strides = array<i32>} : memref<1x8x8x4xf32, #tpu.memory_space<vmem>>, vector<1x8x8x4xf32>,
    return
  }
  func.func @transform_0(%arg0: i32) -> (i32, i32, i32, i32, i32) {
    %c0_i32 = arith.constant 0 : i32
    %c0_i32_0 = arith.constant 0 : i32
    %c0_i32_1 = arith.constant 0 : i32
    %c0_i32_2 = arith.constant 0 : i32
    %c0_i32_3 = arith.constant 0 : i32
    return %arg0, %c0_i32, %c0_i32_0, %c0_i32_1, %c0_i32_2 : i32, i32, i32, i32, i32
  }
  func.func @transform_1(%arg0: i32) -> (i32, i32) {
    %c0_i32 = arith.constant 0 : i32
    %c0_i32_0 = arith.constant 0 : i32
    %c0_i32_1 = arith.constant 0 : i32
    return %c0_i32, %c0_i32_0 : i32, i32
  }
  func.func @transform_2(%arg0: i32) -> (i32, i32) {
    %c0_i32 = arith.constant 0 : i32
    %c0_i32_0 = arith.constant 0 : i32
    %c0_i32_1 = arith.constant 0 : i32
    return %c0_i32, %c0_i32_0 : i32, i32
  }
  func.func @transform_3(%arg0: i32) -> (i32, i32) {
    %c0_i32 = arith.constant 0 : i32
    %c0_i32_0 = arith.constant 0 : i32
    %c0_i32_1 = arith.constant 0 : i32
    return %c0_i32, %c0_i32_0 : i32, i32
  }
  func.func @transform_4(%arg0: i32) -> (i32, i32) {
    %c0_i32 = arith.constant 0 : i32
    %c0_i32_0 = arith.constant 0 : i32
    %c0_i32_1 = arith.constant 0 : i32
    return %c0_i32, %c0_i32_0 : i32, i32
  }
  func.func @transform_5(%arg0: i32) -> (i32, i32) {
    %c0_i32 = arith.constant 0 : i32
    %c0_i32_0 = arith.constant 0 : i32
    %c0_i32_1 = arith.constant 0 : i32
    return %c0_i32, %c0_i32_0 : i32, i32
  }
  func.func @transform_6(%arg0: i32) -> (i32, i32) {
    %c0_i32 = arith.constant 0 : i32
    %c0_i32_0 = arith.constant 0 : i32
    %c0_i32_1 = arith.constant 0 : i32
    return %c0_i32, %c0_i32_0 : i32, i32
  }
  func.func @transform_7(%arg0: i32) -> (i32, i32, i32, i32) {
    %c0_i32 = arith.constant 0 : i32
    %c0_i32_0 = arith.constant 0 : i32
    %c0_i32_1 = arith.constant 0 : i32
    %c0_i32_2 = arith.constant 0 : i32
    return %arg0, %c0_i32, %c0_i32_0, %c0_i32_1 : i32, i32, i32, i32
  }
}

</mosaic_0001>

<llo_original>
// kernel: tpu_custom_call.1
$region0: #{tpu_custom_call.1}
  #allocation0 [shape = 'u32[]', space=smem, size = 0x4, offset = 0x4, fixed_abs, tag = 'smem constant byte address 0x4 - core index']
  #allocation1 [shape = 'u32[144,128]{1,0:T(1,128)}', space=vmem, size = 0x12000, scoped, tag = 'internal scratch']
  #allocation2 [shape = 'f32[4,9,9,2]{3,2,1,0:T(8,128)}', space=vmem, size = 0x48000, scoped, tag = 'scratch operand']
  %s0 = inlined_call_operand.vmem [shape: f32[2,4,8,8,4], index: 0, kind: input, shape index: {}]
  %s1 = inlined_call_operand.vmem [shape: f32[4,2], index: 1, kind: input, shape index: {}]
  %s2 = inlined_call_operand.vmem [shape: f32[1,2], index: 2, kind: input, shape index: {}]
  %s3 = inlined_call_operand.vmem [shape: f32[4,2], index: 3, kind: input, shape index: {}]
  %s4 = inlined_call_operand.vmem [shape: f32[1,2], index: 4, kind: input, shape index: {}]
  %s5 = inlined_call_operand.vmem [shape: f32[18,2], index: 5, kind: input, shape index: {}]
  %s6 = inlined_call_operand.vmem [shape: f32[1,2], index: 6, kind: input, shape index: {}]
  %s7 = inlined_call_operand.vmem [shape: f32[2,8,8,4], index: 7, kind: output, shape index: {}]
  %s8 = sld [smem:[#allocation0]]
  $region61: #{tpu_custom_call.1} parent=0
    _
  %s10 = ssub.s32 1, %s8
  %s11 = scalar_select 0, %s10, %s8
  loop: start=0, step=1, limit=4
  $region2: #{tpu_custom_call.1} parent=0 // loop_pre_header
    _
  $region3: #{tpu_custom_call.1} parent=0 // loop_header
    %s13 = sphi 0, %s17
    %p14 = scmp.ge.s32.totalorder %s13, 4
    %s23 = sphi 0, %s25
    %s26 = sphi 0, %s23
    %s27 = sphi 0, %s26
    %s43 = sphi 0, %s27
    %s47 = sphi 0, %s47
    %s49 = sphi 0, %s47
    %s50 = sphi 0, %s49
    %s64 = sphi 0, %s50
    %s68 = sphi 0, %s68
    %s70 = sphi 0, %s68
    %s71 = sphi 0, %s70
    %s85 = sphi 0, %s71
    %s89 = sphi 0, %s89
    %s91 = sphi 0, %s89
    %s92 = sphi 0, %s91
    %s106 = sphi 0, %s92
    %s110 = sphi 0, %s110
    %s112 = sphi 0, %s110
    %s113 = sphi 0, %s112
    %s127 = sphi 0, %s113
    %s131 = sphi 0, %s131
    %s133 = sphi 0, %s131
    %s134 = sphi 0, %s133
    %s148 = sphi 0, %s134
    %s152 = sphi 0, %s152
    %s154 = sphi 0, %s152
    %s155 = sphi 0, %s154
    %s169 = sphi 0, %s155
    %s175 = sphi 0, %s177
    %s178 = sphi 0, %s175
    %s179 = sphi 0, %s178
    %s195 = sphi 0, %s179
  $region4: #{tpu_custom_call.1} parent=0 // loop_header_branch
    %16 = sbr.rel (%p14) target = $region8
  $region5: #{tpu_custom_call.1} parent=0 // loop_body
    %s18 = ssub.s32 %s13, 1
    %s19 = ssub.s32 %s13, 2
    %s20 = sadd.s32 %s13, 1
    %s21 = ssub.s32 %s13, %s20
    %p22 = scmp.eq.s32.totalorder %s21, 0
    %s24 = sadd.s32 %s23, 1
    %s25 = scalar_select %p22, %s23, %s24
    %p28 = pneg %p22
    %p29 = scmp.eq.s32.totalorder %s13, 1
    %p30 = por %p28, %p29
    %p31 = scmp.ne.s32.totalorder %s23, %s26
    %p32 = scmp.eq.s32.totalorder %s13, 0
    %p33 = por %p31, %p32
    %p34 = scmp.ne.s32.totalorder %s23, %s26
    %p35 = scmp.eq.s32.totalorder %s18, 1
    %p36 = por %p34, %p35
    %p37 = scmp.ne.s32.totalorder %s26, %s27
    %p38 = scmp.eq.s32.totalorder %s18, 0
    %p39 = por %p37, %p38
    %p40 = scmp.ne.s32.totalorder %s26, %s27
    %p41 = scmp.eq.s32.totalorder %s19, 1
    %p42 = por %p40, %p41
    %p44 = scmp.ne.s32.totalorder %s27, %s43
    %p45 = scmp.eq.s32.totalorder %s19, 0
    %p46 = por %p44, %p45
    %s48 = sadd.s32 %s47, 1
    %p51 = scmp.eq.s32.totalorder %s13, 1
    %p52 = scmp.ne.s32.totalorder %s47, %s49
    %p53 = scmp.eq.s32.totalorder %s13, 0
    %p54 = por %p52, %p53
    %p55 = scmp.ne.s32.totalorder %s47, %s49
    %p56 = scmp.eq.s32.totalorder %s18, 1
    %p57 = por %p55, %p56
    %p58 = scmp.ne.s32.totalorder %s49, %s50
    %p59 = scmp.eq.s32.totalorder %s18, 0
    %p60 = por %p58, %p59
    %p61 = scmp.ne.s32.totalorder %s49, %s50
    %p62 = scmp.eq.s32.totalorder %s19, 1
    %p63 = por %p61, %p62
    %p65 = scmp.ne.s32.totalorder %s50, %s64
    %p66 = scmp.eq.s32.totalorder %s19, 0
    %p67 = por %p65, %p66
    %s69 = sadd.s32 %s68, 1
    %p72 = scmp.eq.s32.totalorder %s13, 1
    %p73 = scmp.ne.s32.totalorder %s68, %s70
    %p74 = scmp.eq.s32.totalorder %s13, 0
    %p75 = por %p73, %p74
    %p76 = scmp.ne.s32.totalorder %s68, %s70
    %p77 = scmp.eq.s32.totalorder %s18, 1
    %p78 = por %p76, %p77
    %p79 = scmp.ne.s32.totalorder %s70, %s71
    %p80 = scmp.eq.s32.totalorder %s18, 0
    %p81 = por %p79, %p80
    %p82 = scmp.ne.s32.totalorder %s70, %s71
    %p83 = scmp.eq.s32.totalorder %s19, 1
    %p84 = por %p82, %p83
    %p86 = scmp.ne.s32.totalorder %s71, %s85
    %p87 = scmp.eq.s32.totalorder %s19, 0
    %p88 = por %p86, %p87
    %s90 = sadd.s32 %s89, 1
    %p93 = scmp.eq.s32.totalorder %s13, 1
    %p94 = scmp.ne.s32.totalorder %s89, %s91
    %p95 = scmp.eq.s32.totalorder %s13, 0
    %p96 = por %p94, %p95
    %p97 = scmp.ne.s32.totalorder %s89, %s91
    %p98 = scmp.eq.s32.totalorder %s18, 1
    %p99 = por %p97, %p98
    %p100 = scmp.ne.s32.totalorder %s91, %s92
    %p101 = scmp.eq.s32.totalorder %s18, 0
    %p102 = por %p100, %p101
    %p103 = scmp.ne.s32.totalorder %s91, %s92
    %p104 = scmp.eq.s32.totalorder %s19, 1
    %p105 = por %p103, %p104
    %p107 = scmp.ne.s32.totalorder %s92, %s106
    %p108 = scmp.eq.s32.totalorder %s19, 0
    %p109 = por %p107, %p108
    %s111 = sadd.s32 %s110, 1
    %p114 = scmp.eq.s32.totalorder %s13, 1
    %p115 = scmp.ne.s32.totalorder %s110, %s112
    %p116 = scmp.eq.s32.totalorder %s13, 0
    %p117 = por %p115, %p116
    %p118 = scmp.ne.s32.totalorder %s110, %s112
    %p119 = scmp.eq.s32.totalorder %s18, 1
    %p120 = por %p118, %p119
    %p121 = scmp.ne.s32.totalorder %s112, %s113
    %p122 = scmp.eq.s32.totalorder %s18, 0
    %p123 = por %p121, %p122
    %p124 = scmp.ne.s32.totalorder %s112, %s113
    %p125 = scmp.eq.s32.totalorder %s19, 1
    %p126 = por %p124, %p125
    %p128 = scmp.ne.s32.totalorder %s113, %s127
    %p129 = scmp.eq.s32.totalorder %s19, 0
    %p130 = por %p128, %p129
    %s132 = sadd.s32 %s131, 1
    %p135 = scmp.eq.s32.totalorder %s13, 1
    %p136 = scmp.ne.s32.totalorder %s131, %s133
    %p137 = scmp.eq.s32.totalorder %s13, 0
    %p138 = por %p136, %p137
    %p139 = scmp.ne.s32.totalorder %s131, %s133
    %p140 = scmp.eq.s32.totalorder %s18, 1
    %p141 = por %p139, %p140
    %p142 = scmp.ne.s32.totalorder %s133, %s134
    %p143 = scmp.eq.s32.totalorder %s18, 0
    %p144 = por %p142, %p143
    %p145 = scmp.ne.s32.totalorder %s133, %s134
    %p146 = scmp.eq.s32.totalorder %s19, 1
    %p147 = por %p145, %p146
    %p149 = scmp.ne.s32.totalorder %s134, %s148
    %p150 = scmp.eq.s32.totalorder %s19, 0
    %p151 = por %p149, %p150
    %s153 = sadd.s32 %s152, 1
    %p156 = scmp.eq.s32.totalorder %s13, 1
    %p157 = scmp.ne.s32.totalorder %s152, %s154
    %p158 = scmp.eq.s32.totalorder %s13, 0
    %p159 = por %p157, %p158
    %p160 = scmp.ne.s32.totalorder %s152, %s154
    %p161 = scmp.eq.s32.totalorder %s18, 1
    %p162 = por %p160, %p161
    %p163 = scmp.ne.s32.totalorder %s154, %s155
    %p164 = scmp.eq.s32.totalorder %s18, 0
    %p165 = por %p163, %p164
    %p166 = scmp.ne.s32.totalorder %s154, %s155
    %p167 = scmp.eq.s32.totalorder %s19, 1
    %p168 = por %p166, %p167
    %p170 = scmp.ne.s32.totalorder %s155, %s169
    %p171 = scmp.eq.s32.totalorder %s19, 0
    %p172 = por %p170, %p171
    %s173 = ssub.s32 %s13, %s20
    %p174 = scmp.eq.s32.totalorder %s173, 0
    %s176 = sadd.s32 %s175, 1
    %s177 = scalar_select %p174, %s175, %s176
    %p180 = pneg %p174
    %p181 = scmp.eq.s32.totalorder %s13, 1
    %p182 = por %p180, %p181
    %p183 = scmp.ne.s32.totalorder %s175, %s178
    %p184 = scmp.eq.s32.totalorder %s13, 0
    %p185 = por %p183, %p184
    %p186 = scmp.ne.s32.totalorder %s175, %s178
    %p187 = scmp.eq.s32.totalorder %s18, 1
    %p188 = por %p186, %p187
    %p189 = scmp.ne.s32.totalorder %s178, %s179
    %p190 = scmp.eq.s32.totalorder %s18, 0
    %p191 = por %p189, %p190
    %p192 = scmp.ne.s32.totalorder %s178, %s179
    %p193 = scmp.eq.s32.totalorder %s19, 1
    %p194 = por %p192, %p193
    %p196 = scmp.ne.s32.totalorder %s179, %s195
    %p197 = scmp.eq.s32.totalorder %s19, 0
    %p198 = por %p196, %p197
    %p199 = scmp.le.s32.totalorder 1, %s13
    %p200 = scmp.lt.s32.totalorder %s13, 3
    %p201 = pnand %p199, %p200
    %p202 = pneg %p201
    // Predicated region
    $region9: #{tpu_custom_call.1} parent=5 // pred_check
      _
    $region10: #{tpu_custom_call.1} parent=5 // pred_check_branch
      %204 = sbr.rel (%p201) target = $region12
    $region11: #{tpu_custom_call.1} parent=5 // pred_region
      %s205 = ssub.s32 %s13, 1
      // Predicated region
      $region13: #{tpu_custom_call.1} parent=11 // pred_check
        %p206 = pneg %p60
      $region14: #{tpu_custom_call.1} parent=11 // pred_check_branch
        %208 = sbr.rel (%p206) target = $region16
      $region15: #{tpu_custom_call.1} parent=11 // pred_region
        _
      $region16: #{tpu_custom_call.1} parent=11 // pred_fallthru
        _
      // Predicated region
      $region17: #{tpu_custom_call.1} parent=11 // pred_check
        %p209 = pneg %p81
      $region18: #{tpu_custom_call.1} parent=11 // pred_check_branch
        %211 = sbr.rel (%p209) target = $region20
      $region19: #{tpu_custom_call.1} parent=11 // pred_region
        _
      $region20: #{tpu_custom_call.1} parent=11 // pred_fallthru
        _
      // Predicated region
      $region21: #{tpu_custom_call.1} parent=11 // pred_check
        %p212 = pneg %p102
      $region22: #{tpu_custom_call.1} parent=11 // pred_check_branch
        %214 = sbr.rel (%p212) target = $region24
      $region23: #{tpu_custom_call.1} parent=11 // pred_region
        _
      $region24: #{tpu_custom_call.1} parent=11 // pred_fallthru
        _
      // Predicated region
      $region25: #{tpu_custom_call.1} parent=11 // pred_check
        %p215 = pneg %p123
      $region26: #{tpu_custom_call.1} parent=11 // pred_check_branch
        %217 = sbr.rel (%p215) target = $region28
      $region27: #{tpu_custom_call.1} parent=11 // pred_region
        _
      $region28: #{tpu_custom_call.1} parent=11 // pred_fallthru
        _
      // Predicated region
      $region29: #{tpu_custom_call.1} parent=11 // pred_check
        %p218 = pneg %p144
      $region30: #{tpu_custom_call.1} parent=11 // pred_check_branch
        %220 = sbr.rel (%p218) target = $region32
      $region31: #{tpu_custom_call.1} parent=11 // pred_region
        _
      $region32: #{tpu_custom_call.1} parent=11 // pred_fallthru
        _
      // Predicated region
      $region33: #{tpu_custom_call.1} parent=11 // pred_check
        %p221 = pneg %p165
      $region34: #{tpu_custom_call.1} parent=11 // pred_check_branch
        %223 = sbr.rel (%p221) target = $region36
      $region35: #{tpu_custom_call.1} parent=11 // pred_region
        _
      $region36: #{tpu_custom_call.1} parent=11 // pred_fallthru
        _
    $region12: #{tpu_custom_call.1} parent=5 // pred_fallthru
      _
    %p224 = scmp.lt.s32.totalorder %s13, 2
    // Predicated region
    $region37: #{tpu_custom_call.1} parent=5 // pred_check
      %p225 = pneg %p224
    $region38: #{tpu_custom_call.1} parent=5 // pred_check_branch
      %227 = sbr.rel (%p225) target = $region40
    $region39: #{tpu_custom_call.1} parent=5 // pred_region
      // Predicated region
      $region41: #{tpu_custom_call.1} parent=39 // pred_check
        %p228 = pneg %p33
      $region42: #{tpu_custom_call.1} parent=39 // pred_check_branch
        %230 = sbr.rel (%p228) target = $region44
      $region43: #{tpu_custom_call.1} parent=39 // pred_region
        %p231 = scmp.lt.s32.totalorder %s13, 1
        %s232 = scalar_select %p231, %s13, 1
        %s233 = smul.addr %s232, 32
        %s234 = smul.addr %s233, 8
        %s235 = scalar_lea.vmem %s0, %s234
      $region44: #{tpu_custom_call.1} parent=39 // pred_fallthru
        _
    $region40: #{tpu_custom_call.1} parent=5 // pred_fallthru
      _
    %p236 = scmp.le.s32.totalorder 1, %s13
    %p237 = scmp.lt.s32.totalorder %s13, 3
    %p238 = pnand %p236, %p237
    %p239 = pneg %p238
    // Predicated region
    $region45: #{tpu_custom_call.1} parent=5 // pred_check
      _
    $region46: #{tpu_custom_call.1} parent=5 // pred_check_branch
      %241 = sbr.rel (%p238) target = $region48
    $region47: #{tpu_custom_call.1} parent=5 // pred_region
      %s242 = ssub.s32 %s13, 1
      %p243 = scmp.lt.s32.totalorder %s18, 1
      %s244 = scalar_select %p243, %s18, 1
      %s245 = smul.addr %s244, 32
      %s246 = smul.addr %s245, 8
      %s247 = scalar_lea.vmem %s0, %s246
      %p248 = pneg %p39
      %p249 = pneg %p36
      %p250 = pneg %p60
      %p251 = pneg %p57
      %p252 = pneg %p81
      %p253 = pneg %p78
      %p254 = pneg %p102
      %p255 = pneg %p99
      %p256 = pneg %p123
      %p257 = pneg %p120
      %p258 = pneg %p144
      %p259 = pneg %p141
      %p260 = pneg %p165
      %p261 = pneg %p162
      %p262 = pneg %p191
      %p263 = pneg %p188
      %p264 = scmp.lt.s32.totalorder %s18, 1
      %s265 = scalar_select %p264, %s18, 1
      %s266 = smul.addr %s265, 8
      %s267 = smul.addr %s266, 8
      %s268 = scalar_lea.vmem %s7, %s267
      %p269 = scmp.lt.s32.totalorder %s18, 1
      %s270 = scalar_select %p269, %s18, 1
      %s271 = smul.addr %s270, 32
      %s272 = smul.addr %s271, 8
      %s273 = scalar_lea.vmem %s0, %s272
      %p274 = scmp.lt.s32.totalorder %s18, 1
      %s275 = scalar_select %p274, %s18, 1
      %s276 = smul.addr %s275, 8
      %s277 = smul.addr %s276, 8
      %s278 = scalar_lea.vmem %s7, %s277
      %v279 = vld [vmem:[%s273] sm:$0xff]
      %v280 = vld [vmem:[%s273 + $0x8] sm:$0xff]
      %v281 = vld [vmem:[%s273 + $0x10] sm:$0xff]
      %v282 = vld [vmem:[%s273 + $0x18] sm:$0xff]
      %v283 = vld [vmem:[%s273 + $0x20] sm:$0xff]
      %v284 = vld [vmem:[%s273 + $0x28] sm:$0xff]
      %v285 = vld [vmem:[%s273 + $0x30] sm:$0xff]
      %v286 = vld [vmem:[%s273 + $0x38] sm:$0xff]
      %v287 = vld [vmem:[%s273 + $0x40] sm:$0xff]
      %v288 = vld [vmem:[%s273 + $0x48] sm:$0xff]
      %v289 = vld [vmem:[%s273 + $0x50] sm:$0xff]
      %v290 = vld [vmem:[%s273 + $0x58] sm:$0xff]
      %v291 = vld [vmem:[%s273 + $0x60] sm:$0xff]
      %v292 = vld [vmem:[%s273 + $0x68] sm:$0xff]
      %v293 = vld [vmem:[%s273 + $0x70] sm:$0xff]
      %v294 = vld [vmem:[%s273 + $0x78] sm:$0xff]
      %v295 = vld [vmem:[%s273 + $0x80] sm:$0xff]
      %v296 = vld [vmem:[%s273 + $0x88] sm:$0xff]
      %v297 = vld [vmem:[%s273 + $0x90] sm:$0xff]
      %v298 = vld [vmem:[%s273 + $0x98] sm:$0xff]
      %v299 = vld [vmem:[%s273 + $0xa0] sm:$0xff]
      %v300 = vld [vmem:[%s273 + $0xa8] sm:$0xff]
      %v301 = vld [vmem:[%s273 + $0xb0] sm:$0xff]
      %v302 = vld [vmem:[%s273 + $0xb8] sm:$0xff]
      %v303 = vld [vmem:[%s273 + $0xc0] sm:$0xff]
      %v304 = vld [vmem:[%s273 + $0xc8] sm:$0xff]
      %v305 = vld [vmem:[%s273 + $0xd0] sm:$0xff]
      %v306 = vld [vmem:[%s273 + $0xd8] sm:$0xff]
      %v307 = vld [vmem:[%s273 + $0xe0] sm:$0xff]
      %v308 = vld [vmem:[%s273 + $0xe8] sm:$0xff]
      %v309 = vld [vmem:[%s273 + $0xf0] sm:$0xff]
      %v310 = vld [vmem:[%s273 + $0xf8] sm:$0xff]
      %vm311 = vcmask 31744
      %v312 = vsel %vm311, %v279, -inf
      %v313 = vsel %vm311, %v287, -inf
      %v314 = vmax.f32 %v312, %v313
      %v315 = vsel %vm311, %v295, -inf
      %v316 = vmax.f32 %v314, %v315
      %v317 = vsel %vm311, %v303, -inf
      %v318 = vmax.f32 %v316, %v317
      %v319 = vsel %vm311, %v280, -inf
      %v320 = vsel %vm311, %v288, -inf
      %v321 = vmax.f32 %v319, %v320
      %v322 = vsel %vm311, %v296, -inf
      %v323 = vmax.f32 %v321, %v322
      %v324 = vsel %vm311, %v304, -inf
      %v325 = vmax.f32 %v323, %v324
      %v326 = vsel %vm311, %v281, -inf
      %v327 = vsel %vm311, %v289, -inf
      %v328 = vmax.f32 %v326, %v327
      %v329 = vsel %vm311, %v297, -inf
      %v330 = vmax.f32 %v328, %v329
      %v331 = vsel %vm311, %v305, -inf
      %v332 = vmax.f32 %v330, %v331
      %v333 = vsel %vm311, %v282, -inf
      %v334 = vsel %vm311, %v290, -inf
      %v335 = vmax.f32 %v333, %v334
      %v336 = vsel %vm311, %v298, -inf
      %v337 = vmax.f32 %v335, %v336
      %v338 = vsel %vm311, %v306, -inf
      %v339 = vmax.f32 %v337, %v338
      %v340 = vsel %vm311, %v283, -inf
      %v341 = vsel %vm311, %v291, -inf
      %v342 = vmax.f32 %v340, %v341
      %v343 = vsel %vm311, %v299, -inf
      %v344 = vmax.f32 %v342, %v343
      %v345 = vsel %vm311, %v307, -inf
      %v346 = vmax.f32 %v344, %v345
      %v347 = vsel %vm311, %v284, -inf
      %v348 = vsel %vm311, %v292, -inf
      %v349 = vmax.f32 %v347, %v348
      %v350 = vsel %vm311, %v300, -inf
      %v351 = vmax.f32 %v349, %v350
      %v352 = vsel %vm311, %v308, -inf
      %v353 = vmax.f32 %v351, %v352
      %v354 = vsel %vm311, %v285, -inf
      %v355 = vsel %vm311, %v293, -inf
      %v356 = vmax.f32 %v354, %v355
      %v357 = vsel %vm311, %v301, -inf
      %v358 = vmax.f32 %v356, %v357
      %v359 = vsel %vm311, %v309, -inf
      %v360 = vmax.f32 %v358, %v359
      %v361 = vsel %vm311, %v286, -inf
      %v362 = vsel %vm311, %v294, -inf
      %v363 = vmax.f32 %v361, %v362
      %v364 = vsel %vm311, %v302, -inf
      %v365 = vmax.f32 %v363, %v364
      %v366 = vsel %vm311, %v310, -inf
      %v367 = vmax.f32 %v365, %v366
      %v368 = vld [vmem:[%s1] sm:$0xf]
      %v369 = vld [vmem:[%s2] sm:$0x1]
      %v371 = vlaneseq
      %v372 = vshrl.u32 %v371, 7
      %v373 = vsub.s32 0, %v372
      %v374 = vrot.slane %v369, %v373
      %v377 = vsel %vm311, %v318, 0
      %v380 = vsel %vm311, %v325, 0
      %v383 = vsel %vm311, %v332, 0
      %v386 = vsel %vm311, %v339, 0
      %v389 = vsel %vm311, %v346, 0
      %v392 = vsel %vm311, %v353, 0
      %v395 = vsel %vm311, %v360, 0
      %v398 = vsel %vm311, %v367, 0
      %vm400 = vcmask 1043456
      %v402 = vsel %vm400, %v368, 0
      %404 = vmatprep.subr.mxu0 0.0
      %405 = vmatpush1.msra.mxu0 %v402
      %406 = vmatprep.subr.mxu0 0.0
      %407 = vmatpush1.msra.mxu0 0.0
      %408 = vmatprep.subr.mxu0 0.0
      %409 = vmatpush1.msra.mxu0 0.0
      %410 = vmatprep.subr.mxu0 0.0
      %411 = vmatpush1.msra.mxu0 0.0
      %412 = vmatprep.subr.mxu0 0.0
      %413 = vmatpush1.msra.mxu0 0.0
      %414 = vmatprep.subr.mxu0 0.0
      %415 = vmatpush1.msra.mxu0 0.0
      %416 = vmatprep.subr.mxu0 0.0
      %417 = vmatpush1.msra.mxu0 0.0
      %418 = vmatprep.subr.mxu0 0.0
      %419 = vmatpush1.msra.mxu0 0.0
      %420 = vmatprep.subr.mxu0 0.0
      %421 = vmatpush1.msra.mxu0 0.0
      %422 = vmatprep.subr.mxu0 0.0
      %423 = vmatpush1.msra.mxu0 0.0
      %424 = vmatprep.subr.mxu0 0.0
      %425 = vmatpush1.msra.mxu0 0.0
      %426 = vmatprep.subr.mxu0 0.0
      %427 = vmatpush1.msra.mxu0 0.0
      %428 = vmatprep.subr.mxu0 0.0
      %429 = vmatpush1.msra.mxu0 0.0
      %430 = vmatprep.subr.mxu0 0.0
      %431 = vmatpush1.msra.mxu0 0.0
      %432 = vmatprep.subr.mxu0 0.0
      %433 = vmatpush1.msra.mxu0 0.0
      %434 = vmatprep.subr.mxu0 0.0
      %435 = vmatpush1.msra.mxu0 0.0
      %436 = vmatprep.subr.mxu0 0.0
      %437 = vmatpush1.msra.mxu0 0.0
      %438 = vmatprep.subr.mxu0 0.0
      %439 = vmatpush1.msra.mxu0 0.0
      %440 = vmatprep.subr.mxu0 0.0
      %441 = vmatpush1.msra.mxu0 0.0
      %442 = vmatprep.subr.mxu0 0.0
      %443 = vmatpush1.msra.mxu0 0.0
      %444 = vmatprep.subr.mxu0 0.0
      %445 = vmatpush1.msra.mxu0 0.0
      %446 = vmatprep.subr.mxu0 0.0
      %447 = vmatpush1.msra.mxu0 0.0
      %448 = vmatprep.subr.mxu0 0.0
      %449 = vmatpush1.msra.mxu0 0.0
      %450 = vmatprep.subr.mxu0 0.0
      %451 = vmatpush1.msra.mxu0 0.0
      %452 = vmatprep.subr.mxu0 0.0
      %453 = vmatpush1.msra.mxu0 0.0
      %454 = vmatprep.subr.mxu0 0.0
      %455 = vmatpush1.msra.mxu0 0.0
      %456 = vmatprep.subr.mxu0 0.0
      %457 = vmatpush1.msra.mxu0 0.0
      %458 = vmatprep.subr.mxu0 0.0
      %459 = vmatpush1.msra.mxu0 0.0
      %460 = vmatprep.subr.mxu0 0.0
      %461 = vmatpush1.msra.mxu0 0.0
      %462 = vmatprep.subr.mxu0 0.0
      %463 = vmatpush1.msra.mxu0 0.0
      %464 = vmatprep.subr.mxu0 0.0
      %465 = vmatpush1.msra.mxu0 0.0
      %466 = vmatprep.subr.mxu0 0.0
      %467 = vmatpush1.msra.mxu0 0.0
      %468 = vmatprep.mubr.f32.mxu0 0.0
      %469 = vmatmul.mubr.f32.gmra.mrb[0].mxu0 %v377
      %v470 = vpop.f32.mrb[0].mxu0
      %v471 = vadd.f32 %v374, %v470
      %v472 = vpop.f32.mrb[0].mxu0
      %473 = vmatprep.mubr.f32.mxu0 0.0
      %474 = vmatmul.mubr.f32.gmra.mrb[0].mxu0 %v380
      %v475 = vpop.f32.mrb[0].mxu0
      %v476 = vadd.f32 %v374, %v475
      %v477 = vpop.f32.mrb[0].mxu0
      %478 = vmatprep.mubr.f32.mxu0 0.0
      %479 = vmatmul.mubr.f32.gmra.mrb[0].mxu0 %v383
      %v480 = vpop.f32.mrb[0].mxu0
      %v481 = vadd.f32 %v374, %v480
      %v482 = vpop.f32.mrb[0].mxu0
      %483 = vmatprep.mubr.f32.mxu0 0.0
      %484 = vmatmul.mubr.f32.gmra.mrb[0].mxu0 %v386
      %v485 = vpop.f32.mrb[0].mxu0
      %v486 = vadd.f32 %v374, %v485
      %v487 = vpop.f32.mrb[0].mxu0
      %488 = vmatprep.mubr.f32.mxu0 0.0
      %489 = vmatmul.mubr.f32.gmra.mrb[0].mxu0 %v389
      %v490 = vpop.f32.mrb[0].mxu0
      %v491 = vadd.f32 %v374, %v490
      %v492 = vpop.f32.mrb[0].mxu0
      %493 = vmatprep.mubr.f32.mxu0 0.0
      %494 = vmatmul.mubr.f32.gmra.mrb[0].mxu0 %v392
      %v495 = vpop.f32.mrb[0].mxu0
      %v496 = vadd.f32 %v374, %v495
      %v497 = vpop.f32.mrb[0].mxu0
      %498 = vmatprep.mubr.f32.mxu0 0.0
      %499 = vmatmul.mubr.f32.gmra.mrb[0].mxu0 %v395
      %v500 = vpop.f32.mrb[0].mxu0
      %v501 = vadd.f32 %v374, %v500
      %v502 = vpop.f32.mrb[0].mxu0
      %503 = vmatprep.mubr.f32.mxu0 0.0
      %504 = vmatmul.mubr.f32.gmra.mrb[0].mxu0 %v398
      %v505 = vpop.f32.mrb[0].mxu0
      %v506 = vadd.f32 %v374, %v505
      %v507 = vpop.f32.mrb[0].mxu0
      %508 = vdwg.mxu0
      %v509 = vxor.u32 %v471, 2147483648
      %v510 = vxor.u32 %v476, 2147483648
      %v511 = vxor.u32 %v481, 2147483648
      %v512 = vxor.u32 %v486, 2147483648
      %v513 = vxor.u32 %v491, 2147483648
      %v514 = vxor.u32 %v496, 2147483648
      %v515 = vxor.u32 %v501, 2147483648
      %v516 = vxor.u32 %v506, 2147483648
      %v517 = vmul.f32 %v509, 1.442695
      %v518 = vpow.pop %v517
      %v519 = vmul.f32 %v510, 1.442695
      %v520 = vpow.pop %v519
      %v521 = vmul.f32 %v511, 1.442695
      %v522 = vpow.pop %v521
      %v523 = vmul.f32 %v512, 1.442695
      %v524 = vpow.pop %v523
      %v525 = vmul.f32 %v513, 1.442695
      %v526 = vpow.pop %v525
      %v527 = vmul.f32 %v514, 1.442695
      %v528 = vpow.pop %v527
      %v529 = vmul.f32 %v515, 1.442695
      %v530 = vpow.pop %v529
      %v531 = vmul.f32 %v516, 1.442695
      %v532 = vpow.pop %v531
      %v533 = vadd.f32 %v518, 1.0
      %v534 = vadd.f32 %v520, 1.0
      %v535 = vadd.f32 %v522, 1.0
      %v536 = vadd.f32 %v524, 1.0
      %v537 = vadd.f32 %v526, 1.0
      %v538 = vadd.f32 %v528, 1.0
      %v539 = vadd.f32 %v530, 1.0
      %v540 = vadd.f32 %v532, 1.0
      %v541 = vrcp.pop %v533
      %v542 = vmul.f32 1.0, %v541
      %v543 = vrcp.pop %v534
      %v544 = vmul.f32 1.0, %v543
      %v545 = vrcp.pop %v535
      %v546 = vmul.f32 1.0, %v545
      %v547 = vrcp.pop %v536
      %v548 = vmul.f32 1.0, %v547
      %v549 = vrcp.pop %v537
      %v550 = vmul.f32 1.0, %v549
      %v551 = vrcp.pop %v538
      %v552 = vmul.f32 1.0, %v551
      %v553 = vrcp.pop %v539
      %v554 = vmul.f32 1.0, %v553
      %v555 = vrcp.pop %v540
      %v556 = vmul.f32 1.0, %v555
      %v557 = vmul.f32 %v471, %v542
      %v558 = vmul.f32 %v476, %v544
      %v559 = vmul.f32 %v481, %v546
      %v560 = vmul.f32 %v486, %v548
      %v561 = vmul.f32 %v491, %v550
      %v562 = vmul.f32 %v496, %v552
      %v563 = vmul.f32 %v501, %v554
      %v564 = vmul.f32 %v506, %v556
      %v565 = vld [vmem:[%s3] sm:$0xf]
      %v566 = vld [vmem:[%s4] sm:$0x1]
      %v568 = vlaneseq
      %v569 = vshrl.u32 %v568, 7
      %v570 = vsub.s32 0, %v569
      %v571 = vrot.slane %v566, %v570
      %v574 = vsel %vm311, %v279, 0
      %v577 = vsel %vm311, %v280, 0
      %v580 = vsel %vm311, %v281, 0
      %v583 = vsel %vm311, %v282, 0
      %v586 = vsel %vm311, %v283, 0
      %v589 = vsel %vm311, %v284, 0
      %v592 = vsel %vm311, %v285, 0
      %v595 = vsel %vm311, %v286, 0
      %v598 = vsel %vm311, %v287, 0
      %v601 = vsel %vm311, %v288, 0
      %v604 = vsel %vm311, %v289, 0
      %v607 = vsel %vm311, %v290, 0
      %v610 = vsel %vm311, %v291, 0
      %v613 = vsel %vm311, %v292, 0
      %v616 = vsel %vm311, %v293, 0
      %v619 = vsel %vm311, %v294, 0
      %v622 = vsel %vm311, %v295, 0
      %v625 = vsel %vm311, %v296, 0
      %v628 = vsel %vm311, %v297, 0
      %v631 = vsel %vm311, %v298, 0
      %v634 = vsel %vm311, %v299, 0
      %v637 = vsel %vm311, %v300, 0
      %v640 = vsel %vm311, %v301, 0
      %v643 = vsel %vm311, %v302, 0
      %v646 = vsel %vm311, %v303, 0
      %v649 = vsel %vm311, %v304, 0
      %v652 = vsel %vm311, %v305, 0
      %v655 = vsel %vm311, %v306, 0
      %v658 = vsel %vm311, %v307, 0
      %v661 = vsel %vm311, %v308, 0
      %v664 = vsel %vm311, %v309, 0
      %v667 = vsel %vm311, %v310, 0
      %v670 = vsel %vm400, %v565, 0
      %672 = vmatprep.subr.mxu0 0.0
      %673 = vmatpush1.msra.mxu0 %v670
      %674 = vmatprep.subr.mxu0 0.0
      %675 = vmatpush1.msra.mxu0 0.0
      %676 = vmatprep.subr.mxu0 0.0
      %677 = vmatpush1.msra.mxu0 0.0
      %678 = vmatprep.subr.mxu0 0.0
      %679 = vmatpush1.msra.mxu0 0.0
      %680 = vmatprep.subr.mxu0 0.0
      %681 = vmatpush1.msra.mxu0 0.0
      %682 = vmatprep.subr.mxu0 0.0
      %683 = vmatpush1.msra.mxu0 0.0
      %684 = vmatprep.subr.mxu0 0.0
      %685 = vmatpush1.msra.mxu0 0.0
      %686 = vmatprep.subr.mxu0 0.0
      %687 = vmatpush1.msra.mxu0 0.0
      %688 = vmatprep.subr.mxu0 0.0
      %689 = vmatpush1.msra.mxu0 0.0
      %690 = vmatprep.subr.mxu0 0.0
      %691 = vmatpush1.msra.mxu0 0.0
      %692 = vmatprep.subr.mxu0 0.0
      %693 = vmatpush1.msra.mxu0 0.0
      %694 = vmatprep.subr.mxu0 0.0
      %695 = vmatpush1.msra.mxu0 0.0
      %696 = vmatprep.subr.mxu0 0.0
      %697 = vmatpush1.msra.mxu0 0.0
      %698 = vmatprep.subr.mxu0 0.0
      %699 = vmatpush1.msra.mxu0 0.0
      %700 = vmatprep.subr.mxu0 0.0
      %701 = vmatpush1.msra.mxu0 0.0
      %702 = vmatprep.subr.mxu0 0.0
      %703 = vmatpush1.msra.mxu0 0.0
      %704 = vmatprep.subr.mxu0 0.0
      %705 = vmatpush1.msra.mxu0 0.0
      %706 = vmatprep.subr.mxu0 0.0
      %707 = vmatpush1.msra.mxu0 0.0
      %708 = vmatprep.subr.mxu0 0.0
      %709 = vmatpush1.msra.mxu0 0.0
      %710 = vmatprep.subr.mxu0 0.0
      %711 = vmatpush1.msra.mxu0 0.0
      %712 = vmatprep.subr.mxu0 0.0
      %713 = vmatpush1.msra.mxu0 0.0
      %714 = vmatprep.subr.mxu0 0.0
      %715 = vmatpush1.msra.mxu0 0.0
      %716 = vmatprep.subr.mxu0 0.0
      %717 = vmatpush1.msra.mxu0 0.0
      %718 = vmatprep.subr.mxu0 0.0
      %719 = vmatpush1.msra.mxu0 0.0
      %720 = vmatprep.subr.mxu0 0.0
      %721 = vmatpush1.msra.mxu0 0.0
      %722 = vmatprep.subr.mxu0 0.0
      %723 = vmatpush1.msra.mxu0 0.0
      %724 = vmatprep.subr.mxu0 0.0
      %725 = vmatpush1.msra.mxu0 0.0
      %726 = vmatprep.subr.mxu0 0.0
      %727 = vmatpush1.msra.mxu0 0.0
      %728 = vmatprep.subr.mxu0 0.0
      %729 = vmatpush1.msra.mxu0 0.0
      %730 = vmatprep.subr.mxu0 0.0
      %731 = vmatpush1.msra.mxu0 0.0
      %732 = vmatprep.subr.mxu0 0.0
      %733 = vmatpush1.msra.mxu0 0.0
      %734 = vmatprep.subr.mxu0 0.0
      %735 = vmatpush1.msra.mxu0 0.0
      %736 = vmatprep.mubr.f32.mxu0 0.0
      %737 = vmatmul.mubr.f32.gmra.mrb[0].mxu0 %v574
      %v738 = vpop.f32.mrb[0].mxu0
      %v739 = vadd.f32 %v571, %v738
      %v740 = vpop.f32.mrb[0].mxu0
      %741 = vmatprep.mubr.f32.mxu0 0.0
      %742 = vmatmul.mubr.f32.gmra.mrb[0].mxu0 %v577
      %v743 = vpop.f32.mrb[0].mxu0
      %v744 = vadd.f32 %v571, %v743
      %v745 = vpop.f32.mrb[0].mxu0
      %746 = vmatprep.mubr.f32.mxu0 0.0
      %747 = vmatmul.mubr.f32.gmra.mrb[0].mxu0 %v580
      %v748 = vpop.f32.mrb[0].mxu0
      %v749 = vadd.f32 %v571, %v748
      %v750 = vpop.f32.mrb[0].mxu0
      %751 = vmatprep.mubr.f32.mxu0 0.0
      %752 = vmatmul.mubr.f32.gmra.mrb[0].mxu0 %v583
      %v753 = vpop.f32.mrb[0].mxu0
      %v754 = vadd.f32 %v571, %v753
      %v755 = vpop.f32.mrb[0].mxu0
      %756 = vmatprep.mubr.f32.mxu0 0.0
      %757 = vmatmul.mubr.f32.gmra.mrb[0].mxu0 %v586
      %v758 = vpop.f32.mrb[0].mxu0
      %v759 = vadd.f32 %v571, %v758
      %v760 = vpop.f32.mrb[0].mxu0
      %761 = vmatprep.mubr.f32.mxu0 0.0
      %762 = vmatmul.mubr.f32.gmra.mrb[0].mxu0 %v589
      %v763 = vpop.f32.mrb[0].mxu0
      %v764 = vadd.f32 %v571, %v763
      %v765 = vpop.f32.mrb[0].mxu0
      %766 = vmatprep.mubr.f32.mxu0 0.0
      %767 = vmatmul.mubr.f32.gmra.mrb[0].mxu0 %v592
      %v768 = vpop.f32.mrb[0].mxu0
      %v769 = vadd.f32 %v571, %v768
      %v770 = vpop.f32.mrb[0].mxu0
      %771 = vmatprep.mubr.f32.mxu0 0.0
      %772 = vmatmul.mubr.f32.gmra.mrb[0].mxu0 %v595
      %v773 = vpop.f32.mrb[0].mxu0
      %v774 = vadd.f32 %v571, %v773
      %v775 = vpop.f32.mrb[0].mxu0
      %776 = vmatprep.mubr.f32.mxu0 0.0
      %777 = vmatmul.mubr.f32.gmra.mrb[0].mxu0 %v598
      %v778 = vpop.f32.mrb[0].mxu0
      %v779 = vadd.f32 %v571, %v778
      %v780 = vpop.f32.mrb[0].mxu0
      %781 = vmatprep.mubr.f32.mxu0 0.0
      %782 = vmatmul.mubr.f32.gmra.mrb[0].mxu0 %v601
      %v783 = vpop.f32.mrb[0].mxu0
      %v784 = vadd.f32 %v571, %v783
      %v785 = vpop.f32.mrb[0].mxu0
      %786 = vmatprep.mubr.f32.mxu0 0.0
      %787 = vmatmul.mubr.f32.gmra.mrb[0].mxu0 %v604
      %v788 = vpop.f32.mrb[0].mxu0
      %v789 = vadd.f32 %v571, %v788
      %v790 = vpop.f32.mrb[0].mxu0
      %791 = vmatprep.mubr.f32.mxu0 0.0
      %792 = vmatmul.mubr.f32.gmra.mrb[0].mxu0 %v607
      %v793 = vpop.f32.mrb[0].mxu0
      %v794 = vadd.f32 %v571, %v793
      %v795 = vpop.f32.mrb[0].mxu0
      %796 = vmatprep.mubr.f32.mxu0 0.0
      %797 = vmatmul.mubr.f32.gmra.mrb[0].mxu0 %v610
      %v798 = vpop.f32.mrb[0].mxu0
      %v799 = vadd.f32 %v571, %v798
      %v800 = vpop.f32.mrb[0].mxu0
      %801 = vmatprep.mubr.f32.mxu0 0.0
      %802 = vmatmul.mubr.f32.gmra.mrb[0].mxu0 %v613
      %v803 = vpop.f32.mrb[0].mxu0
      %v804 = vadd.f32 %v571, %v803
      %v805 = vpop.f32.mrb[0].mxu0
      %806 = vmatprep.mubr.f32.mxu0 0.0
      %807 = vmatmul.mubr.f32.gmra.mrb[0].mxu0 %v616
      %v808 = vpop.f32.mrb[0].mxu0
      %v809 = vadd.f32 %v571, %v808
      %v810 = vpop.f32.mrb[0].mxu0
      %811 = vmatprep.mubr.f32.mxu0 0.0
      %812 = vmatmul.mubr.f32.gmra.mrb[0].mxu0 %v619
      %v813 = vpop.f32.mrb[0].mxu0
      %v814 = vadd.f32 %v571, %v813
      %v815 = vpop.f32.mrb[0].mxu0
      %816 = vmatprep.mubr.f32.mxu0 0.0
      %817 = vmatmul.mubr.f32.gmra.mrb[0].mxu0 %v622
      %v818 = vpop.f32.mrb[0].mxu0
      %v819 = vadd.f32 %v571, %v818
      %v820 = vpop.f32.mrb[0].mxu0
      %821 = vmatprep.mubr.f32.mxu0 0.0
      %822 = vmatmul.mubr.f32.gmra.mrb[0].mxu0 %v625
      %v823 = vpop.f32.mrb[0].mxu0
      %v824 = vadd.f32 %v571, %v823
      %v825 = vpop.f32.mrb[0].mxu0
      %826 = vmatprep.mubr.f32.mxu0 0.0
      %827 = vmatmul.mubr.f32.gmra.mrb[0].mxu0 %v628
      %v828 = vpop.f32.mrb[0].mxu0
      %v829 = vadd.f32 %v571, %v828
      %v830 = vpop.f32.mrb[0].mxu0
      %831 = vmatprep.mubr.f32.mxu0 0.0
      %832 = vmatmul.mubr.f32.gmra.mrb[0].mxu0 %v631
      %v833 = vpop.f32.mrb[0].mxu0
      %v834 = vadd.f32 %v571, %v833
      %v835 = vpop.f32.mrb[0].mxu0
      %836 = vmatprep.mubr.f32.mxu0 0.0
      %837 = vmatmul.mubr.f32.gmra.mrb[0].mxu0 %v634
      %v838 = vpop.f32.mrb[0].mxu0
      %v839 = vadd.f32 %v571, %v838
      %v840 = vpop.f32.mrb[0].mxu0
      %841 = vmatprep.mubr.f32.mxu0 0.0
      %842 = vmatmul.mubr.f32.gmra.mrb[0].mxu0 %v637
      %v843 = vpop.f32.mrb[0].mxu0
      %v844 = vadd.f32 %v571, %v843
      %v845 = vpop.f32.mrb[0].mxu0
      %846 = vmatprep.mubr.f32.mxu0 0.0
      %847 = vmatmul.mubr.f32.gmra.mrb[0].mxu0 %v640
      %v848 = vpop.f32.mrb[0].mxu0
      %v849 = vadd.f32 %v571, %v848
      %v850 = vpop.f32.mrb[0].mxu0
      %851 = vmatprep.mubr.f32.mxu0 0.0
      %852 = vmatmul.mubr.f32.gmra.mrb[0].mxu0 %v643
      %v853 = vpop.f32.mrb[0].mxu0
      %v854 = vadd.f32 %v571, %v853
      %v855 = vpop.f32.mrb[0].mxu0
      %856 = vmatprep.mubr.f32.mxu0 0.0
      %857 = vmatmul.mubr.f32.gmra.mrb[0].mxu0 %v646
      %v858 = vpop.f32.mrb[0].mxu0
      %v859 = vadd.f32 %v571, %v858
      %v860 = vpop.f32.mrb[0].mxu0
      %861 = vmatprep.mubr.f32.mxu0 0.0
      %862 = vmatmul.mubr.f32.gmra.mrb[0].mxu0 %v649
      %v863 = vpop.f32.mrb[0].mxu0
      %v864 = vadd.f32 %v571, %v863
      %v865 = vpop.f32.mrb[0].mxu0
      %866 = vmatprep.mubr.f32.mxu0 0.0
      %867 = vmatmul.mubr.f32.gmra.mrb[0].mxu0 %v652
      %v868 = vpop.f32.mrb[0].mxu0
      %v869 = vadd.f32 %v571, %v868
      %v870 = vpop.f32.mrb[0].mxu0
      %871 = vmatprep.mubr.f32.mxu0 0.0
      %872 = vmatmul.mubr.f32.gmra.mrb[0].mxu0 %v655
      %v873 = vpop.f32.mrb[0].mxu0
      %v874 = vadd.f32 %v571, %v873
      %v875 = vpop.f32.mrb[0].mxu0
      %876 = vmatprep.mubr.f32.mxu0 0.0
      %877 = vmatmul.mubr.f32.gmra.mrb[0].mxu0 %v658
      %v878 = vpop.f32.mrb[0].mxu0
      %v879 = vadd.f32 %v571, %v878
      %v880 = vpop.f32.mrb[0].mxu0
      %881 = vmatprep.mubr.f32.mxu0 0.0
      %882 = vmatmul.mubr.f32.gmra.mrb[0].mxu0 %v661
      %v883 = vpop.f32.mrb[0].mxu0
      %v884 = vadd.f32 %v571, %v883
      %v885 = vpop.f32.mrb[0].mxu0
      %886 = vmatprep.mubr.f32.mxu0 0.0
      %887 = vmatmul.mubr.f32.gmra.mrb[0].mxu0 %v664
      %v888 = vpop.f32.mrb[0].mxu0
      %v889 = vadd.f32 %v571, %v888
      %v890 = vpop.f32.mrb[0].mxu0
      %891 = vmatprep.mubr.f32.mxu0 0.0
      %892 = vmatmul.mubr.f32.gmra.mrb[0].mxu0 %v667
      %v893 = vpop.f32.mrb[0].mxu0
      %v894 = vadd.f32 %v571, %v893
      %v895 = vpop.f32.mrb[0].mxu0
      %896 = vdwg.mxu0
      %v897 = vxor.u32 %v739, 2147483648
      %v898 = vxor.u32 %v744, 2147483648
      %v899 = vxor.u32 %v749, 2147483648
      %v900 = vxor.u32 %v754, 2147483648
      %v901 = vxor.u32 %v759, 2147483648
      %v902 = vxor.u32 %v764, 2147483648
      %v903 = vxor.u32 %v769, 2147483648
      %v904 = vxor.u32 %v774, 2147483648
      %v905 = vxor.u32 %v779, 2147483648
      %v906 = vxor.u32 %v784, 2147483648
      %v907 = vxor.u32 %v789, 2147483648
      %v908 = vxor.u32 %v794, 2147483648
      %v909 = vxor.u32 %v799, 2147483648
      %v910 = vxor.u32 %v804, 2147483648
      %v911 = vxor.u32 %v809, 2147483648
      %v912 = vxor.u32 %v814, 2147483648
      %v913 = vxor.u32 %v819, 2147483648
      %v914 = vxor.u32 %v824, 2147483648
      %v915 = vxor.u32 %v829, 2147483648
      %v916 = vxor.u32 %v834, 2147483648
      %v917 = vxor.u32 %v839, 2147483648
      %v918 = vxor.u32 %v844, 2147483648
      %v919 = vxor.u32 %v849, 2147483648
      %v920 = vxor.u32 %v854, 2147483648
      %v921 = vxor.u32 %v859, 2147483648
      %v922 = vxor.u32 %v864, 2147483648
      %v923 = vxor.u32 %v869, 2147483648
      %v924 = vxor.u32 %v874, 2147483648
      %v925 = vxor.u32 %v879, 2147483648
      %v926 = vxor.u32 %v884, 2147483648
      %v927 = vxor.u32 %v889, 2147483648
      %v928 = vxor.u32 %v894, 2147483648
      %v929 = vmul.f32 %v897, 1.442695
      %v930 = vpow.pop %v929
      %v931 = vmul.f32 %v898, 1.442695
      %v932 = vpow.pop %v931
      %v933 = vmul.f32 %v899, 1.442695
      %v934 = vpow.pop %v933
      %v935 = vmul.f32 %v900, 1.442695
      %v936 = vpow.pop %v935
      %v937 = vmul.f32 %v901, 1.442695
      %v938 = vpow.pop %v937
      %v939 = vmul.f32 %v902, 1.442695
      %v940 = vpow.pop %v939
      %v941 = vmul.f32 %v903, 1.442695
      %v942 = vpow.pop %v941
      %v943 = vmul.f32 %v904, 1.442695
      %v944 = vpow.pop %v943
      %v945 = vmul.f32 %v905, 1.442695
      %v946 = vpow.pop %v945
      %v947 = vmul.f32 %v906, 1.442695
      %v948 = vpow.pop %v947
      %v949 = vmul.f32 %v907, 1.442695
      %v950 = vpow.pop %v949
      %v951 = vmul.f32 %v908, 1.442695
      %v952 = vpow.pop %v951
      %v953 = vmul.f32 %v909, 1.442695
      %v954 = vpow.pop %v953
      %v955 = vmul.f32 %v910, 1.442695
      %v956 = vpow.pop %v955
      %v957 = vmul.f32 %v911, 1.442695
      %v958 = vpow.pop %v957
      %v959 = vmul.f32 %v912, 1.442695
      %v960 = vpow.pop %v959
      %v961 = vmul.f32 %v913, 1.442695
      %v962 = vpow.pop %v961
      %v963 = vmul.f32 %v914, 1.442695
      %v964 = vpow.pop %v963
      %v965 = vmul.f32 %v915, 1.442695
      %v966 = vpow.pop %v965
      %v967 = vmul.f32 %v916, 1.442695
      %v968 = vpow.pop %v967
      %v969 = vmul.f32 %v917, 1.442695
      %v970 = vpow.pop %v969
      %v971 = vmul.f32 %v918, 1.442695
      %v972 = vpow.pop %v971
      %v973 = vmul.f32 %v919, 1.442695
      %v974 = vpow.pop %v973
      %v975 = vmul.f32 %v920, 1.442695
      %v976 = vpow.pop %v975
      %v977 = vmul.f32 %v921, 1.442695
      %v978 = vpow.pop %v977
      %v979 = vmul.f32 %v922, 1.442695
      %v980 = vpow.pop %v979
      %v981 = vmul.f32 %v923, 1.442695
      %v982 = vpow.pop %v981
      %v983 = vmul.f32 %v924, 1.442695
      %v984 = vpow.pop %v983
      %v985 = vmul.f32 %v925, 1.442695
      %v986 = vpow.pop %v985
      %v987 = vmul.f32 %v926, 1.442695
      %v988 = vpow.pop %v987
      %v989 = vmul.f32 %v927, 1.442695
      %v990 = vpow.pop %v989
      %v991 = vmul.f32 %v928, 1.442695
      %v992 = vpow.pop %v991
      %v993 = vadd.f32 %v930, 1.0
      %v994 = vadd.f32 %v932, 1.0
      %v995 = vadd.f32 %v934, 1.0
      %v996 = vadd.f32 %v936, 1.0
      %v997 = vadd.f32 %v938, 1.0
      %v998 = vadd.f32 %v940, 1.0
      %v999 = vadd.f32 %v942, 1.0
      %v1000 = vadd.f32 %v944, 1.0
      %v1001 = vadd.f32 %v946, 1.0
      %v1002 = vadd.f32 %v948, 1.0
      %v1003 = vadd.f32 %v950, 1.0
      %v1004 = vadd.f32 %v952, 1.0
      %v1005 = vadd.f32 %v954, 1.0
      %v1006 = vadd.f32 %v956, 1.0
      %v1007 = vadd.f32 %v958, 1.0
      %v1008 = vadd.f32 %v960, 1.0
      %v1009 = vadd.f32 %v962, 1.0
      %v1010 = vadd.f32 %v964, 1.0
      %v1011 = vadd.f32 %v966, 1.0
      %v1012 = vadd.f32 %v968, 1.0
      %v1013 = vadd.f32 %v970, 1.0
      %v1014 = vadd.f32 %v972, 1.0
      %v1015 = vadd.f32 %v974, 1.0
      %v1016 = vadd.f32 %v976, 1.0
      %v1017 = vadd.f32 %v978, 1.0
      %v1018 = vadd.f32 %v980, 1.0
      %v1019 = vadd.f32 %v982, 1.0
      %v1020 = vadd.f32 %v984, 1.0
      %v1021 = vadd.f32 %v986, 1.0
      %v1022 = vadd.f32 %v988, 1.0
      %v1023 = vadd.f32 %v990, 1.0
      %v1024 = vadd.f32 %v992, 1.0
      %v1025 = vrcp.pop %v993
      %v1026 = vmul.f32 1.0, %v1025
      %v1027 = vrcp.pop %v994
      %v1028 = vmul.f32 1.0, %v1027
      %v1029 = vrcp.pop %v995
      %v1030 = vmul.f32 1.0, %v1029
      %v1031 = vrcp.pop %v996
      %v1032 = vmul.f32 1.0, %v1031
      %v1033 = vrcp.pop %v997
      %v1034 = vmul.f32 1.0, %v1033
      %v1035 = vrcp.pop %v998
      %v1036 = vmul.f32 1.0, %v1035
      %v1037 = vrcp.pop %v999
      %v1038 = vmul.f32 1.0, %v1037
      %v1039 = vrcp.pop %v1000
      %v1040 = vmul.f32 1.0, %v1039
      %v1041 = vrcp.pop %v1001
      %v1042 = vmul.f32 1.0, %v1041
      %v1043 = vrcp.pop %v1002
      %v1044 = vmul.f32 1.0, %v1043
      %v1045 = vrcp.pop %v1003
      %v1046 = vmul.f32 1.0, %v1045
      %v1047 = vrcp.pop %v1004
      %v1048 = vmul.f32 1.0, %v1047
      %v1049 = vrcp.pop %v1005
      %v1050 = vmul.f32 1.0, %v1049
      %v1051 = vrcp.pop %v1006
      %v1052 = vmul.f32 1.0, %v1051
      %v1053 = vrcp.pop %v1007
      %v1054 = vmul.f32 1.0, %v1053
      %v1055 = vrcp.pop %v1008
      %v1056 = vmul.f32 1.0, %v1055
      %v1057 = vrcp.pop %v1009
      %v1058 = vmul.f32 1.0, %v1057
      %v1059 = vrcp.pop %v1010
      %v1060 = vmul.f32 1.0, %v1059
      %v1061 = vrcp.pop %v1011
      %v1062 = vmul.f32 1.0, %v1061
      %v1063 = vrcp.pop %v1012
      %v1064 = vmul.f32 1.0, %v1063
      %v1065 = vrcp.pop %v1013
      %v1066 = vmul.f32 1.0, %v1065
      %v1067 = vrcp.pop %v1014
      %v1068 = vmul.f32 1.0, %v1067
      %v1069 = vrcp.pop %v1015
      %v1070 = vmul.f32 1.0, %v1069
      %v1071 = vrcp.pop %v1016
      %v1072 = vmul.f32 1.0, %v1071
      %v1073 = vrcp.pop %v1017
      %v1074 = vmul.f32 1.0, %v1073
      %v1075 = vrcp.pop %v1018
      %v1076 = vmul.f32 1.0, %v1075
      %v1077 = vrcp.pop %v1019
      %v1078 = vmul.f32 1.0, %v1077
      %v1079 = vrcp.pop %v1020
      %v1080 = vmul.f32 1.0, %v1079
      %v1081 = vrcp.pop %v1021
      %v1082 = vmul.f32 1.0, %v1081
      %v1083 = vrcp.pop %v1022
      %v1084 = vmul.f32 1.0, %v1083
      %v1085 = vrcp.pop %v1023
      %v1086 = vmul.f32 1.0, %v1085
      %v1087 = vrcp.pop %v1024
      %v1088 = vmul.f32 1.0, %v1087
      %v1089 = vmul.f32 %v739, %v1026
      %v1090 = vmul.f32 %v744, %v1028
      %v1091 = vmul.f32 %v749, %v1030
      %v1092 = vmul.f32 %v754, %v1032
      %v1093 = vmul.f32 %v759, %v1034
      %v1094 = vmul.f32 %v764, %v1036
      %v1095 = vmul.f32 %v769, %v1038
      %v1096 = vmul.f32 %v774, %v1040
      %v1097 = vmul.f32 %v779, %v1042
      %v1098 = vmul.f32 %v784, %v1044
      %v1099 = vmul.f32 %v789, %v1046
      %v1100 = vmul.f32 %v794, %v1048
      %v1101 = vmul.f32 %v799, %v1050
      %v1102 = vmul.f32 %v804, %v1052
      %v1103 = vmul.f32 %v809, %v1054
      %v1104 = vmul.f32 %v814, %v1056
      %v1105 = vmul.f32 %v819, %v1058
      %v1106 = vmul.f32 %v824, %v1060
      %v1107 = vmul.f32 %v829, %v1062
      %v1108 = vmul.f32 %v834, %v1064
      %v1109 = vmul.f32 %v839, %v1066
      %v1110 = vmul.f32 %v844, %v1068
      %v1111 = vmul.f32 %v849, %v1070
      %v1112 = vmul.f32 %v854, %v1072
      %v1113 = vmul.f32 %v859, %v1074
      %v1114 = vmul.f32 %v864, %v1076
      %v1115 = vmul.f32 %v869, %v1078
      %v1116 = vmul.f32 %v874, %v1080
      %v1117 = vmul.f32 %v879, %v1082
      %v1118 = vmul.f32 %v884, %v1084
      %v1119 = vmul.f32 %v889, %v1086
      %v1120 = vmul.f32 %v894, %v1088
      %vm1121 = vcmask 15360
      %1122 = vst.msk [vmem:[#allocation2] sm:$0xff] %vm1121, 0.0
      %vm1123 = vcmask 8192
      %1124 = vst.msk [vmem:[#allocation2 + $0x8] sm:$0x1] %vm1123, 0.0
      %1125 = vst.msk [vmem:[#allocation2 + $0x10] sm:$0xff] %vm1121, 0.0
      %1126 = vst.msk [vmem:[#allocation2 + $0x18] sm:$0x1] %vm1123, 0.0
      %1127 = vst.msk [vmem:[#allocation2 + $0x20] sm:$0xff] %vm1121, 0.0
      %1128 = vst.msk [vmem:[#allocation2 + $0x28] sm:$0x1] %vm1123, 0.0
      %1129 = vst.msk [vmem:[#allocation2 + $0x30] sm:$0xff] %vm1121, 0.0
      %1130 = vst.msk [vmem:[#allocation2 + $0x38] sm:$0x1] %vm1123, 0.0
      %1131 = vst.msk [vmem:[#allocation2 + $0x40] sm:$0xff] %vm1121, 0.0
      %1132 = vst.msk [vmem:[#allocation2 + $0x48] sm:$0x1] %vm1123, 0.0
      %1133 = vst.msk [vmem:[#allocation2 + $0x50] sm:$0xff] %vm1121, 0.0
      %1134 = vst.msk [vmem:[#allocation2 + $0x58] sm:$0x1] %vm1123, 0.0
      %1135 = vst.msk [vmem:[#allocation2 + $0x60] sm:$0xff] %vm1121, 0.0
      %1136 = vst.msk [vmem:[#allocation2 + $0x68] sm:$0x1] %vm1123, 0.0
      %1137 = vst.msk [vmem:[#allocation2 + $0x70] sm:$0xff] %vm1121, 0.0
      %1138 = vst.msk [vmem:[#allocation2 + $0x78] sm:$0x1] %vm1123, 0.0
      %1139 = vst.msk [vmem:[#allocation2 + $0x80] sm:$0xff] %vm1121, 0.0
      %1140 = vst.msk [vmem:[#allocation2 + $0x88] sm:$0x1] %vm1123, 0.0
      %1141 = vst.msk [vmem:[#allocation2 + $0x90] sm:$0xff] %vm1121, 0.0
      %1142 = vst.msk [vmem:[#allocation2 + $0x98] sm:$0x1] %vm1123, 0.0
      %1143 = vst.msk [vmem:[#allocation2 + $0xa0] sm:$0xff] %vm1121, 0.0
      %1144 = vst.msk [vmem:[#allocation2 + $0xa8] sm:$0x1] %vm1123, 0.0
      %1145 = vst.msk [vmem:[#allocation2 + $0xb0] sm:$0xff] %vm1121, 0.0
      %1146 = vst.msk [vmem:[#allocation2 + $0xb8] sm:$0x1] %vm1123, 0.0
      %1147 = vst.msk [vmem:[#allocation2 + $0xc0] sm:$0xff] %vm1121, 0.0
      %1148 = vst.msk [vmem:[#allocation2 + $0xc8] sm:$0x1] %vm1123, 0.0
      %1149 = vst.msk [vmem:[#allocation2 + $0xd0] sm:$0xff] %vm1121, 0.0
      %1150 = vst.msk [vmem:[#allocation2 + $0xd8] sm:$0x1] %vm1123, 0.0
      %1151 = vst.msk [vmem:[#allocation2 + $0xe0] sm:$0xff] %vm1121, 0.0
      %1152 = vst.msk [vmem:[#allocation2 + $0xe8] sm:$0x1] %vm1123, 0.0
      %1153 = vst.msk [vmem:[#allocation2 + $0xf0] sm:$0xff] %vm1121, 0.0
      %1154 = vst.msk [vmem:[#allocation2 + $0xf8] sm:$0x1] %vm1123, 0.0
      %1155 = vst.msk [vmem:[#allocation2 + $0x100] sm:$0xff] %vm1121, 0.0
      %1156 = vst.msk [vmem:[#allocation2 + $0x108] sm:$0x1] %vm1123, 0.0
      %1157 = vst.msk [vmem:[#allocation2 + $0x110] sm:$0xff] %vm1121, 0.0
      %1158 = vst.msk [vmem:[#allocation2 + $0x118] sm:$0x1] %vm1123, 0.0
      %1159 = vst.msk [vmem:[#allocation2 + $0x120] sm:$0xff] %vm1121, 0.0
      %1160 = vst.msk [vmem:[#allocation2 + $0x128] sm:$0x1] %vm1123, 0.0
      %1161 = vst.msk [vmem:[#allocation2 + $0x130] sm:$0xff] %vm1121, 0.0
      %1162 = vst.msk [vmem:[#allocation2 + $0x138] sm:$0x1] %vm1123, 0.0
      %1163 = vst.msk [vmem:[#allocation2 + $0x140] sm:$0xff] %vm1121, 0.0
      %1164 = vst.msk [vmem:[#allocation2 + $0x148] sm:$0x1] %vm1123, 0.0
      %1165 = vst.msk [vmem:[#allocation2 + $0x150] sm:$0xff] %vm1121, 0.0
      %1166 = vst.msk [vmem:[#allocation2 + $0x158] sm:$0x1] %vm1123, 0.0
      %1167 = vst.msk [vmem:[#allocation2 + $0x160] sm:$0xff] %vm1121, 0.0
      %1168 = vst.msk [vmem:[#allocation2 + $0x168] sm:$0x1] %vm1123, 0.0
      %1169 = vst.msk [vmem:[#allocation2 + $0x170] sm:$0xff] %vm1121, 0.0
      %1170 = vst.msk [vmem:[#allocation2 + $0x178] sm:$0x1] %vm1123, 0.0
      %1171 = vst.msk [vmem:[#allocation2 + $0x180] sm:$0xff] %vm1121, 0.0
      %1172 = vst.msk [vmem:[#allocation2 + $0x188] sm:$0x1] %vm1123, 0.0
      %1173 = vst.msk [vmem:[#allocation2 + $0x190] sm:$0xff] %vm1121, 0.0
      %1174 = vst.msk [vmem:[#allocation2 + $0x198] sm:$0x1] %vm1123, 0.0
      %1175 = vst.msk [vmem:[#allocation2 + $0x1a0] sm:$0xff] %vm1121, 0.0
      %1176 = vst.msk [vmem:[#allocation2 + $0x1a8] sm:$0x1] %vm1123, 0.0
      %1177 = vst.msk [vmem:[#allocation2 + $0x1b0] sm:$0xff] %vm1121, 0.0
      %1178 = vst.msk [vmem:[#allocation2 + $0x1b8] sm:$0x1] %vm1123, 0.0
      %1179 = vst.msk [vmem:[#allocation2 + $0x1c0] sm:$0xff] %vm1121, 0.0
      %1180 = vst.msk [vmem:[#allocation2 + $0x1c8] sm:$0x1] %vm1123, 0.0
      %1181 = vst.msk [vmem:[#allocation2 + $0x1d0] sm:$0xff] %vm1121, 0.0
      %1182 = vst.msk [vmem:[#allocation2 + $0x1d8] sm:$0x1] %vm1123, 0.0
      %1183 = vst.msk [vmem:[#allocation2 + $0x1e0] sm:$0xff] %vm1121, 0.0
      %1184 = vst.msk [vmem:[#allocation2 + $0x1e8] sm:$0x1] %vm1123, 0.0
      %1185 = vst.msk [vmem:[#allocation2 + $0x1f0] sm:$0xff] %vm1121, 0.0
      %1186 = vst.msk [vmem:[#allocation2 + $0x1f8] sm:$0x1] %vm1123, 0.0
      %1187 = vst.msk [vmem:[#allocation2 + $0x200] sm:$0xff] %vm1121, 0.0
      %1188 = vst.msk [vmem:[#allocation2 + $0x208] sm:$0x1] %vm1123, 0.0
      %1189 = vst.msk [vmem:[#allocation2 + $0x210] sm:$0xff] %vm1121, 0.0
      %1190 = vst.msk [vmem:[#allocation2 + $0x218] sm:$0x1] %vm1123, 0.0
      %1191 = vst.msk [vmem:[#allocation2 + $0x220] sm:$0xff] %vm1121, 0.0
      %1192 = vst.msk [vmem:[#allocation2 + $0x228] sm:$0x1] %vm1123, 0.0
      %1193 = vst.msk [vmem:[#allocation2 + $0x230] sm:$0xff] %vm1121, 0.0
      %1194 = vst.msk [vmem:[#allocation2 + $0x238] sm:$0x1] %vm1123, 0.0
      %s1195 = scalar_lea.vmem [#allocation2], 16
      %1196 = vst.msk [vmem:[%s1195 + $0x1] sm:$0xff] %vm1121, %v1089
      %1197 = vst.msk [vmem:[%s1195 + $0x11] sm:$0xff] %vm1121, %v1090
      %1198 = vst.msk [vmem:[%s1195 + $0x21] sm:$0xff] %vm1121, %v1091
      %1199 = vst.msk [vmem:[%s1195 + $0x31] sm:$0xff] %vm1121, %v1092
      %1200 = vst.msk [vmem:[%s1195 + $0x41] sm:$0xff] %vm1121, %v1093
      %1201 = vst.msk [vmem:[%s1195 + $0x51] sm:$0xff] %vm1121, %v1094
      %1202 = vst.msk [vmem:[%s1195 + $0x61] sm:$0xff] %vm1121, %v1095
      %1203 = vst.msk [vmem:[%s1195 + $0x71] sm:$0xff] %vm1121, %v1096
      %1204 = vst.msk [vmem:[%s1195 + $0x91] sm:$0xff] %vm1121, %v1097
      %1205 = vst.msk [vmem:[%s1195 + $0xa1] sm:$0xff] %vm1121, %v1098
      %1206 = vst.msk [vmem:[%s1195 + $0xb1] sm:$0xff] %vm1121, %v1099
      %1207 = vst.msk [vmem:[%s1195 + $0xc1] sm:$0xff] %vm1121, %v1100
      %1208 = vst.msk [vmem:[%s1195 + $0xd1] sm:$0xff] %vm1121, %v1101
      %1209 = vst.msk [vmem:[%s1195 + $0xe1] sm:$0xff] %vm1121, %v1102
      %1210 = vst.msk [vmem:[%s1195 + $0xf1] sm:$0xff] %vm1121, %v1103
      %1211 = vst.msk [vmem:[%s1195 + $0x101] sm:$0xff] %vm1121, %v1104
      %1212 = vst.msk [vmem:[%s1195 + $0x121] sm:$0xff] %vm1121, %v1105
      %1213 = vst.msk [vmem:[%s1195 + $0x131] sm:$0xff] %vm1121, %v1106
      %1214 = vst.msk [vmem:[%s1195 + $0x141] sm:$0xff] %vm1121, %v1107
      %1215 = vst.msk [vmem:[%s1195 + $0x151] sm:$0xff] %vm1121, %v1108
      %1216 = vst.msk [vmem:[%s1195 + $0x161] sm:$0xff] %vm1121, %v1109
      %1217 = vst.msk [vmem:[%s1195 + $0x171] sm:$0xff] %vm1121, %v1110
      %1218 = vst.msk [vmem:[%s1195 + $0x181] sm:$0xff] %vm1121, %v1111
      %1219 = vst.msk [vmem:[%s1195 + $0x191] sm:$0xff] %vm1121, %v1112
      %1220 = vst.msk [vmem:[%s1195 + $0x1b1] sm:$0xff] %vm1121, %v1113
      %1221 = vst.msk [vmem:[%s1195 + $0x1c1] sm:$0xff] %vm1121, %v1114
      %1222 = vst.msk [vmem:[%s1195 + $0x1d1] sm:$0xff] %vm1121, %v1115
      %1223 = vst.msk [vmem:[%s1195 + $0x1e1] sm:$0xff] %vm1121, %v1116
      %1224 = vst.msk [vmem:[%s1195 + $0x1f1] sm:$0xff] %vm1121, %v1117
      %1225 = vst.msk [vmem:[%s1195 + $0x201] sm:$0xff] %vm1121, %v1118
      %1226 = vst.msk [vmem:[%s1195 + $0x211] sm:$0xff] %vm1121, %v1119
      %1227 = vst.msk [vmem:[%s1195 + $0x221] sm:$0xff] %vm1121, %v1120
      %s1228 = scalar_lea.vmem [#allocation2], 432
      %v1229 = vld [vmem:[%s1228] sm:$0xff]
      %v1230 = vld [vmem:[%s1228 + $0x10] sm:$0xff]
      %v1231 = vld [vmem:[%s1228 + $0x20] sm:$0xff]
      %v1232 = vld [vmem:[%s1228 + $0x30] sm:$0xff]
      %v1233 = vld [vmem:[%s1228 + $0x40] sm:$0xff]
      %v1234 = vld [vmem:[%s1228 + $0x50] sm:$0xff]
      %v1235 = vld [vmem:[%s1228 + $0x60] sm:$0xff]
      %v1236 = vld [vmem:[%s1228 + $0x70] sm:$0xff]
      %s1237 = scalar_lea.vmem [#allocation2], 288
      %v1238 = vld [vmem:[%s1237 + $0x1] sm:$0xff]
      %v1239 = vld [vmem:[%s1237 + $0x11] sm:$0xff]
      %v1240 = vld [vmem:[%s1237 + $0x21] sm:$0xff]
      %v1241 = vld [vmem:[%s1237 + $0x31] sm:$0xff]
      %v1242 = vld [vmem:[%s1237 + $0x41] sm:$0xff]
      %v1243 = vld [vmem:[%s1237 + $0x51] sm:$0xff]
      %v1244 = vld [vmem:[%s1237 + $0x61] sm:$0xff]
      %v1245 = vld [vmem:[%s1237 + $0x71] sm:$0xff]
      %v1246 = vld [vmem:[%s1228 + $0x1] sm:$0xff]
      %v1247 = vld [vmem:[%s1228 + $0x11] sm:$0xff]
      %v1248 = vld [vmem:[%s1228 + $0x21] sm:$0xff]
      %v1249 = vld [vmem:[%s1228 + $0x31] sm:$0xff]
      %v1250 = vld [vmem:[%s1228 + $0x41] sm:$0xff]
      %v1251 = vld [vmem:[%s1228 + $0x51] sm:$0xff]
      %v1252 = vld [vmem:[%s1228 + $0x61] sm:$0xff]
      %v1253 = vld [vmem:[%s1228 + $0x71] sm:$0xff]
      %s1254 = scalar_lea.vmem [#allocation2], 160
      %v1255 = vld [vmem:[%s1254] sm:$0xff]
      %v1256 = vld [vmem:[%s1254 + $0x10] sm:$0xff]
      %v1257 = vld [vmem:[%s1254 + $0x20] sm:$0xff]
      %v1258 = vld [vmem:[%s1254 + $0x30] sm:$0xff]
      %v1259 = vld [vmem:[%s1254 + $0x40] sm:$0xff]
      %v1260 = vld [vmem:[%s1254 + $0x50] sm:$0xff]
      %v1261 = vld [vmem:[%s1254 + $0x60] sm:$0xff]
      %v1262 = vld [vmem:[%s1254 + $0x70] sm:$0xff]
      %v1263 = vld [vmem:[%s1195 + $0x1] sm:$0xff]
      %v1264 = vld [vmem:[%s1195 + $0x11] sm:$0xff]
      %v1265 = vld [vmem:[%s1195 + $0x21] sm:$0xff]
      %v1266 = vld [vmem:[%s1195 + $0x31] sm:$0xff]
      %v1267 = vld [vmem:[%s1195 + $0x41] sm:$0xff]
      %v1268 = vld [vmem:[%s1195 + $0x51] sm:$0xff]
      %v1269 = vld [vmem:[%s1195 + $0x61] sm:$0xff]
      %v1270 = vld [vmem:[%s1195 + $0x71] sm:$0xff]
      %v1271 = vld [vmem:[%s1254 + $0x1] sm:$0xff]
      %v1272 = vld [vmem:[%s1254 + $0x11] sm:$0xff]
      %v1273 = vld [vmem:[%s1254 + $0x21] sm:$0xff]
      %v1274 = vld [vmem:[%s1254 + $0x31] sm:$0xff]
      %v1275 = vld [vmem:[%s1254 + $0x41] sm:$0xff]
      %v1276 = vld [vmem:[%s1254 + $0x51] sm:$0xff]
      %v1277 = vld [vmem:[%s1254 + $0x61] sm:$0xff]
      %v1278 = vld [vmem:[%s1254 + $0x71] sm:$0xff]
      %s1279 = scalar_lea.vmem [#allocation2], 448
      %v1280 = vld [vmem:[%s1279] sm:$0xff]
      %v1281 = vld [vmem:[%s1279 + $0x10] sm:$0xff]
      %v1282 = vld [vmem:[%s1279 + $0x20] sm:$0xff]
      %v1283 = vld [vmem:[%s1279 + $0x30] sm:$0xff]
      %v1284 = vld [vmem:[%s1279 + $0x40] sm:$0xff]
      %v1285 = vld [vmem:[%s1279 + $0x50] sm:$0xff]
      %v1286 = vld [vmem:[%s1279 + $0x60] sm:$0xff]
      %v1287 = vld [vmem:[%s1279 + $0x70] sm:$0xff]
      %s1288 = scalar_lea.vmem [#allocation2], 304
      %v1289 = vld [vmem:[%s1288 + $0x1] sm:$0xff]
      %v1290 = vld [vmem:[%s1288 + $0x11] sm:$0xff]
      %v1291 = vld [vmem:[%s1288 + $0x21] sm:$0xff]
      %v1292 = vld [vmem:[%s1288 + $0x31] sm:$0xff]
      %v1293 = vld [vmem:[%s1288 + $0x41] sm:$0xff]
      %v1294 = vld [vmem:[%s1288 + $0x51] sm:$0xff]
      %v1295 = vld [vmem:[%s1288 + $0x61] sm:$0xff]
      %v1296 = vld [vmem:[%s1288 + $0x71] sm:$0xff]
      %v1297 = vld [vmem:[%s1279 + $0x1] sm:$0xff]
      %v1298 = vld [vmem:[%s1279 + $0x11] sm:$0xff]
      %v1299 = vld [vmem:[%s1279 + $0x21] sm:$0xff]
      %v1300 = vld [vmem:[%s1279 + $0x31] sm:$0xff]
      %v1301 = vld [vmem:[%s1279 + $0x41] sm:$0xff]
      %v1302 = vld [vmem:[%s1279 + $0x51] sm:$0xff]
      %v1303 = vld [vmem:[%s1279 + $0x61] sm:$0xff]
      %v1304 = vld [vmem:[%s1279 + $0x71] sm:$0xff]
      %1313 = vrot.lane.b32.xlu0 %v1238, 2
      %v1314 = vpop.permute.xlu0 %1313
      %1315 = vrot.lane.b32.xlu0 %v1239, 2
      %v1316 = vpop.permute.xlu0 %1315
      %1317 = vrot.lane.b32.xlu0 %v1240, 2
      %v1318 = vpop.permute.xlu0 %1317
      %1319 = vrot.lane.b32.xlu0 %v1241, 2
      %v1320 = vpop.permute.xlu0 %1319
      %1321 = vrot.lane.b32.xlu0 %v1242, 2
      %v1322 = vpop.permute.xlu0 %1321
      %1323 = vrot.lane.b32.xlu0 %v1243, 2
      %v1324 = vpop.permute.xlu0 %1323
      %1325 = vrot.lane.b32.xlu0 %v1244, 2
      %v1326 = vpop.permute.xlu0 %1325
      %1327 = vrot.lane.b32.xlu0 %v1245, 2
      %v1328 = vpop.permute.xlu0 %1327
      %1345 = vrot.lane.b32.xlu0 %v1246, 4
      %v1346 = vpop.permute.xlu0 %1345
      %1347 = vrot.lane.b32.xlu0 %v1247, 4
      %v1348 = vpop.permute.xlu0 %1347
      %1349 = vrot.lane.b32.xlu0 %v1248, 4
      %v1350 = vpop.permute.xlu0 %1349
      %1351 = vrot.lane.b32.xlu0 %v1249, 4
      %v1352 = vpop.permute.xlu0 %1351
      %1353 = vrot.lane.b32.xlu0 %v1250, 4
      %v1354 = vpop.permute.xlu0 %1353
      %1355 = vrot.lane.b32.xlu0 %v1251, 4
      %v1356 = vpop.permute.xlu0 %1355
      %1357 = vrot.lane.b32.xlu0 %v1252, 4
      %v1358 = vpop.permute.xlu0 %1357
      %1359 = vrot.lane.b32.xlu0 %v1253, 4
      %v1360 = vpop.permute.xlu0 %1359
      %1377 = vrot.lane.b32.xlu0 %v1255, 6
      %v1378 = vpop.permute.xlu0 %1377
      %1379 = vrot.lane.b32.xlu0 %v1256, 6
      %v1380 = vpop.permute.xlu0 %1379
      %1381 = vrot.lane.b32.xlu0 %v1257, 6
      %v1382 = vpop.permute.xlu0 %1381
      %1383 = vrot.lane.b32.xlu0 %v1258, 6
      %v1384 = vpop.permute.xlu0 %1383
      %1385 = vrot.lane.b32.xlu0 %v1259, 6
      %v1386 = vpop.permute.xlu0 %1385
      %1387 = vrot.lane.b32.xlu0 %v1260, 6
      %v1388 = vpop.permute.xlu0 %1387
      %1389 = vrot.lane.b32.xlu0 %v1261, 6
      %v1390 = vpop.permute.xlu0 %1389
      %1391 = vrot.lane.b32.xlu0 %v1262, 6
      %v1392 = vpop.permute.xlu0 %1391
      %1409 = vrot.lane.b32.xlu0 %v1263, 8
      %v1410 = vpop.permute.xlu0 %1409
      %1411 = vrot.lane.b32.xlu0 %v1264, 8
      %v1412 = vpop.permute.xlu0 %1411
      %1413 = vrot.lane.b32.xlu0 %v1265, 8
      %v1414 = vpop.permute.xlu0 %1413
      %1415 = vrot.lane.b32.xlu0 %v1266, 8
      %v1416 = vpop.permute.xlu0 %1415
      %1417 = vrot.lane.b32.xlu0 %v1267, 8
      %v1418 = vpop.permute.xlu0 %1417
      %1419 = vrot.lane.b32.xlu0 %v1268, 8
      %v1420 = vpop.permute.xlu0 %1419
      %1421 = vrot.lane.b32.xlu0 %v1269, 8
      %v1422 = vpop.permute.xlu0 %1421
      %1423 = vrot.lane.b32.xlu0 %v1270, 8
      %v1424 = vpop.permute.xlu0 %1423
      %1441 = vrot.lane.b32.xlu0 %v1271, 10
      %v1442 = vpop.permute.xlu0 %1441
      %1443 = vrot.lane.b32.xlu0 %v1272, 10
      %v1444 = vpop.permute.xlu0 %1443
      %1445 = vrot.lane.b32.xlu0 %v1273, 10
      %v1446 = vpop.permute.xlu0 %1445
      %1447 = vrot.lane.b32.xlu0 %v1274, 10
      %v1448 = vpop.permute.xlu0 %1447
      %1449 = vrot.lane.b32.xlu0 %v1275, 10
      %v1450 = vpop.permute.xlu0 %1449
      %1451 = vrot.lane.b32.xlu0 %v1276, 10
      %v1452 = vpop.permute.xlu0 %1451
      %1453 = vrot.lane.b32.xlu0 %v1277, 10
      %v1454 = vpop.permute.xlu0 %1453
      %1455 = vrot.lane.b32.xlu0 %v1278, 10
      %v1456 = vpop.permute.xlu0 %1455
      %1473 = vrot.lane.b32.xlu0 %v1280, 12
      %v1474 = vpop.permute.xlu0 %1473
      %1475 = vrot.lane.b32.xlu0 %v1281, 12
      %v1476 = vpop.permute.xlu0 %1475
      %1477 = vrot.lane.b32.xlu0 %v1282, 12
      %v1478 = vpop.permute.xlu0 %1477
      %1479 = vrot.lane.b32.xlu0 %v1283, 12
      %v1480 = vpop.permute.xlu0 %1479
      %1481 = vrot.lane.b32.xlu0 %v1284, 12
      %v1482 = vpop.permute.xlu0 %1481
      %1483 = vrot.lane.b32.xlu0 %v1285, 12
      %v1484 = vpop.permute.xlu0 %1483
      %1485 = vrot.lane.b32.xlu0 %v1286, 12
      %v1486 = vpop.permute.xlu0 %1485
      %1487 = vrot.lane.b32.xlu0 %v1287, 12
      %v1488 = vpop.permute.xlu0 %1487
      %1505 = vrot.lane.b32.xlu0 %v1289, 14
      %v1506 = vpop.permute.xlu0 %1505
      %1507 = vrot.lane.b32.xlu0 %v1290, 14
      %v1508 = vpop.permute.xlu0 %1507
      %1509 = vrot.lane.b32.xlu0 %v1291, 14
      %v1510 = vpop.permute.xlu0 %1509
      %1511 = vrot.lane.b32.xlu0 %v1292, 14
      %v1512 = vpop.permute.xlu0 %1511
      %1513 = vrot.lane.b32.xlu0 %v1293, 14
      %v1514 = vpop.permute.xlu0 %1513
      %1515 = vrot.lane.b32.xlu0 %v1294, 14
      %v1516 = vpop.permute.xlu0 %1515
      %1517 = vrot.lane.b32.xlu0 %v1295, 14
      %v1518 = vpop.permute.xlu0 %1517
      %1519 = vrot.lane.b32.xlu0 %v1296, 14
      %v1520 = vpop.permute.xlu0 %1519
      %1537 = vrot.lane.b32.xlu0 %v1297, 16
      %v1538 = vpop.permute.xlu0 %1537
      %1539 = vrot.lane.b32.xlu0 %v1298, 16
      %v1540 = vpop.permute.xlu0 %1539
      %1541 = vrot.lane.b32.xlu0 %v1299, 16
      %v1542 = vpop.permute.xlu0 %1541
      %1543 = vrot.lane.b32.xlu0 %v1300, 16
      %v1544 = vpop.permute.xlu0 %1543
      %1545 = vrot.lane.b32.xlu0 %v1301, 16
      %v1546 = vpop.permute.xlu0 %1545
      %1547 = vrot.lane.b32.xlu0 %v1302, 16
      %v1548 = vpop.permute.xlu0 %1547
      %1549 = vrot.lane.b32.xlu0 %v1303, 16
      %v1550 = vpop.permute.xlu0 %1549
      %1551 = vrot.lane.b32.xlu0 %v1304, 16
      %v1552 = vpop.permute.xlu0 %1551
      %v1561 = vsel %vm1121, %v1229, %v1314
      %v1562 = vsel %vm1121, %v1230, %v1316
      %v1563 = vsel %vm1121, %v1231, %v1318
      %v1564 = vsel %vm1121, %v1232, %v1320
      %v1565 = vsel %vm1121, %v1233, %v1322
      %v1566 = vsel %vm1121, %v1234, %v1324
      %v1567 = vsel %vm1121, %v1235, %v1326
      %v1568 = vsel %vm1121, %v1236, %v1328
      %v1569 = vsel %vm311, %v1561, %v1346
      %v1570 = vsel %vm311, %v1562, %v1348
      %v1571 = vsel %vm311, %v1563, %v1350
      %v1572 = vsel %vm311, %v1564, %v1352
      %v1573 = vsel %vm311, %v1565, %v1354
      %v1574 = vsel %vm311, %v1566, %v1356
      %v1575 = vsel %vm311, %v1567, %v1358
      %v1576 = vsel %vm311, %v1568, %v1360
      %vm1577 = vcmask 48128
      %v1578 = vsel %vm1577, %v1569, %v1378
      %v1579 = vsel %vm1577, %v1570, %v1380
      %v1580 = vsel %vm1577, %v1571, %v1382
      %v1581 = vsel %vm1577, %v1572, %v1384
      %v1582 = vsel %vm1577, %v1573, %v1386
      %v1583 = vsel %vm1577, %v1574, %v1388
      %v1584 = vsel %vm1577, %v1575, %v1390
      %v1585 = vsel %vm1577, %v1576, %v1392
      %vm1586 = vcmask 64512
      %v1587 = vsel %vm1586, %v1578, %v1410
      %v1588 = vsel %vm1586, %v1579, %v1412
      %v1589 = vsel %vm1586, %v1580, %v1414
      %v1590 = vsel %vm1586, %v1581, %v1416
      %v1591 = vsel %vm1586, %v1582, %v1418
      %v1592 = vsel %vm1586, %v1583, %v1420
      %v1593 = vsel %vm1586, %v1584, %v1422
      %v1594 = vsel %vm1586, %v1585, %v1424
      %vm1595 = vcmask 80896
      %v1596 = vsel %vm1595, %v1587, %v1442
      %v1597 = vsel %vm1595, %v1588, %v1444
      %v1598 = vsel %vm1595, %v1589, %v1446
      %v1599 = vsel %vm1595, %v1590, %v1448
      %v1600 = vsel %vm1595, %v1591, %v1450
      %v1601 = vsel %vm1595, %v1592, %v1452
      %v1602 = vsel %vm1595, %v1593, %v1454
      %v1603 = vsel %vm1595, %v1594, %v1456
      %vm1604 = vcmask 97280
      %v1605 = vsel %vm1604, %v1596, %v1474
      %v1606 = vsel %vm1604, %v1597, %v1476
      %v1607 = vsel %vm1604, %v1598, %v1478
      %v1608 = vsel %vm1604, %v1599, %v1480
      %v1609 = vsel %vm1604, %v1600, %v1482
      %v1610 = vsel %vm1604, %v1601, %v1484
      %v1611 = vsel %vm1604, %v1602, %v1486
      %v1612 = vsel %vm1604, %v1603, %v1488
      %vm1613 = vcmask 113664
      %v1614 = vsel %vm1613, %v1605, %v1506
      %v1615 = vsel %vm1613, %v1606, %v1508
      %v1616 = vsel %vm1613, %v1607, %v1510
      %v1617 = vsel %vm1613, %v1608, %v1512
      %v1618 = vsel %vm1613, %v1609, %v1514
      %v1619 = vsel %vm1613, %v1610, %v1516
      %v1620 = vsel %vm1613, %v1611, %v1518
      %v1621 = vsel %vm1613, %v1612, %v1520
      %vm1622 = vcmask 130048
      %v1623 = vsel %vm1622, %v1614, %v1538
      %v1624 = vsel %vm1622, %v1615, %v1540
      %v1625 = vsel %vm1622, %v1616, %v1542
      %v1626 = vsel %vm1622, %v1617, %v1544
      %v1627 = vsel %vm1622, %v1618, %v1546
      %v1628 = vsel %vm1622, %v1619, %v1548
      %v1629 = vsel %vm1622, %v1620, %v1550
      %v1630 = vsel %vm1622, %v1621, %v1552
      %v1631 = vld [vmem:[%s5] sm:$0xff]
      %v1632 = vld [vmem:[%s5 + $0x8] sm:$0xff]
      %v1633 = vld [vmem:[%s5 + $0x10] sm:$0x3]
      %v1634 = vld [vmem:[%s6] sm:$0x1]
      %v1636 = vlaneseq
      %v1637 = vshrl.u32 %v1636, 7
      %v1638 = vsub.s32 0, %v1637
      %v1639 = vrot.slane %v1634, %v1638
      %vm1641 = vcmask 146432
      %v1643 = vsel %vm1641, %v1623, 0
      %v1646 = vsel %vm1641, %v1624, 0
      %v1649 = vsel %vm1641, %v1625, 0
      %v1652 = vsel %vm1641, %v1626, 0
      %v1655 = vsel %vm1641, %v1627, 0
      %v1658 = vsel %vm1641, %v1628, 0
      %v1661 = vsel %vm1641, %v1629, 0
      %v1664 = vsel %vm1641, %v1630, 0
      %vm1666 = vcmask 1041408
      %v1668 = vsel %vm1666, %v1633, 0
      %1670 = vmatprep.subr.mxu0 0.0
      %1671 = vmatpush1.msra.mxu0 %v1631
      %1672 = vmatprep.subr.mxu0 0.0
      %1673 = vmatpush1.msra.mxu0 %v1632
      %1674 = vmatprep.subr.mxu0 0.0
      %1675 = vmatpush1.msra.mxu0 %v1668
      %1676 = vmatprep.subr.mxu0 0.0
      %1677 = vmatpush1.msra.mxu0 0.0
      %1678 = vmatprep.subr.mxu0 0.0
      %1679 = vmatpush1.msra.mxu0 0.0
      %1680 = vmatprep.subr.mxu0 0.0
      %1681 = vmatpush1.msra.mxu0 0.0
      %1682 = vmatprep.subr.mxu0 0.0
      %1683 = vmatpush1.msra.mxu0 0.0
      %1684 = vmatprep.subr.mxu0 0.0
      %1685 = vmatpush1.msra.mxu0 0.0
      %1686 = vmatprep.subr.mxu0 0.0
      %1687 = vmatpush1.msra.mxu0 0.0
      %1688 = vmatprep.subr.mxu0 0.0
      %1689 = vmatpush1.msra.mxu0 0.0
      %1690 = vmatprep.subr.mxu0 0.0
      %1691 = vmatpush1.msra.mxu0 0.0
      %1692 = vmatprep.subr.mxu0 0.0
      %1693 = vmatpush1.msra.mxu0 0.0
      %1694 = vmatprep.subr.mxu0 0.0
      %1695 = vmatpush1.msra.mxu0 0.0
      %1696 = vmatprep.subr.mxu0 0.0
      %1697 = vmatpush1.msra.mxu0 0.0
      %1698 = vmatprep.subr.mxu0 0.0
      %1699 = vmatpush1.msra.mxu0 0.0
      %1700 = vmatprep.subr.mxu0 0.0
      %1701 = vmatpush1.msra.mxu0 0.0
      %1702 = vmatprep.subr.mxu0 0.0
      %1703 = vmatpush1.msra.mxu0 0.0
      %1704 = vmatprep.subr.mxu0 0.0
      %1705 = vmatpush1.msra.mxu0 0.0
      %1706 = vmatprep.subr.mxu0 0.0
      %1707 = vmatpush1.msra.mxu0 0.0
      %1708 = vmatprep.subr.mxu0 0.0
      %1709 = vmatpush1.msra.mxu0 0.0
      %1710 = vmatprep.subr.mxu0 0.0
      %1711 = vmatpush1.msra.mxu0 0.0
      %1712 = vmatprep.subr.mxu0 0.0
      %1713 = vmatpush1.msra.mxu0 0.0
      %1714 = vmatprep.subr.mxu0 0.0
      %1715 = vmatpush1.msra.mxu0 0.0
      %1716 = vmatprep.subr.mxu0 0.0
      %1717 = vmatpush1.msra.mxu0 0.0
      %1718 = vmatprep.subr.mxu0 0.0
      %1719 = vmatpush1.msra.mxu0 0.0
      %1720 = vmatprep.subr.mxu0 0.0
      %1721 = vmatpush1.msra.mxu0 0.0
      %1722 = vmatprep.subr.mxu0 0.0
      %1723 = vmatpush1.msra.mxu0 0.0
      %1724 = vmatprep.subr.mxu0 0.0
      %1725 = vmatpush1.msra.mxu0 0.0
      %1726 = vmatprep.subr.mxu0 0.0
      %1727 = vmatpush1.msra.mxu0 0.0
      %1728 = vmatprep.subr.mxu0 0.0
      %1729 = vmatpush1.msra.mxu0 0.0
      %1730 = vmatprep.subr.mxu0 0.0
      %1731 = vmatpush1.msra.mxu0 0.0
      %1732 = vmatprep.subr.mxu0 0.0
      %1733 = vmatpush1.msra.mxu0 0.0
      %1734 = vmatprep.mubr.f32.mxu0 0.0
      %1735 = vmatmul.mubr.f32.gmra.mrb[0].mxu0 %v1643
      %v1736 = vpop.f32.mrb[0].mxu0
      %v1737 = vadd.f32 %v1639, %v1736
      %v1738 = vpop.f32.mrb[0].mxu0
      %1739 = vmatprep.mubr.f32.mxu0 0.0
      %1740 = vmatmul.mubr.f32.gmra.mrb[0].mxu0 %v1646
      %v1741 = vpop.f32.mrb[0].mxu0
      %v1742 = vadd.f32 %v1639, %v1741
      %v1743 = vpop.f32.mrb[0].mxu0
      %1744 = vmatprep.mubr.f32.mxu0 0.0
      %1745 = vmatmul.mubr.f32.gmra.mrb[0].mxu0 %v1649
      %v1746 = vpop.f32.mrb[0].mxu0
      %v1747 = vadd.f32 %v1639, %v1746
      %v1748 = vpop.f32.mrb[0].mxu0
      %1749 = vmatprep.mubr.f32.mxu0 0.0
      %1750 = vmatmul.mubr.f32.gmra.mrb[0].mxu0 %v1652
      %v1751 = vpop.f32.mrb[0].mxu0
      %v1752 = vadd.f32 %v1639, %v1751
      %v1753 = vpop.f32.mrb[0].mxu0
      %1754 = vmatprep.mubr.f32.mxu0 0.0
      %1755 = vmatmul.mubr.f32.gmra.mrb[0].mxu0 %v1655
      %v1756 = vpop.f32.mrb[0].mxu0
      %v1757 = vadd.f32 %v1639, %v1756
      %v1758 = vpop.f32.mrb[0].mxu0
      %1759 = vmatprep.mubr.f32.mxu0 0.0
      %1760 = vmatmul.mubr.f32.gmra.mrb[0].mxu0 %v1658
      %v1761 = vpop.f32.mrb[0].mxu0
      %v1762 = vadd.f32 %v1639, %v1761
      %v1763 = vpop.f32.mrb[0].mxu0
      %1764 = vmatprep.mubr.f32.mxu0 0.0
      %1765 = vmatmul.mubr.f32.gmra.mrb[0].mxu0 %v1661
      %v1766 = vpop.f32.mrb[0].mxu0
      %v1767 = vadd.f32 %v1639, %v1766
      %v1768 = vpop.f32.mrb[0].mxu0
      %1769 = vmatprep.mubr.f32.mxu0 0.0
      %1770 = vmatmul.mubr.f32.gmra.mrb[0].mxu0 %v1664
      %v1771 = vpop.f32.mrb[0].mxu0
      %v1772 = vadd.f32 %v1639, %v1771
      %v1773 = vpop.f32.mrb[0].mxu0
      %1774 = vdwg.mxu0
      %v1775 = vxor.u32 %v1737, 2147483648
      %v1776 = vxor.u32 %v1742, 2147483648
      %v1777 = vxor.u32 %v1747, 2147483648
      %v1778 = vxor.u32 %v1752, 2147483648
      %v1779 = vxor.u32 %v1757, 2147483648
      %v1780 = vxor.u32 %v1762, 2147483648
      %v1781 = vxor.u32 %v1767, 2147483648
      %v1782 = vxor.u32 %v1772, 2147483648
      %v1783 = vmul.f32 %v1775, 1.442695
      %v1784 = vpow.pop %v1783
      %v1785 = vmul.f32 %v1776, 1.442695
      %v1786 = vpow.pop %v1785
      %v1787 = vmul.f32 %v1777, 1.442695
      %v1788 = vpow.pop %v1787
      %v1789 = vmul.f32 %v1778, 1.442695
      %v1790 = vpow.pop %v1789
      %v1791 = vmul.f32 %v1779, 1.442695
      %v1792 = vpow.pop %v1791
      %v1793 = vmul.f32 %v1780, 1.442695
      %v1794 = vpow.pop %v1793
      %v1795 = vmul.f32 %v1781, 1.442695
      %v1796 = vpow.pop %v1795
      %v1797 = vmul.f32 %v1782, 1.442695
      %v1798 = vpow.pop %v1797
      %v1799 = vadd.f32 %v1784, 1.0
      %v1800 = vadd.f32 %v1786, 1.0
      %v1801 = vadd.f32 %v1788, 1.0
      %v1802 = vadd.f32 %v1790, 1.0
      %v1803 = vadd.f32 %v1792, 1.0
      %v1804 = vadd.f32 %v1794, 1.0
      %v1805 = vadd.f32 %v1796, 1.0
      %v1806 = vadd.f32 %v1798, 1.0
      %v1807 = vrcp.pop %v1799
      %v1808 = vmul.f32 1.0, %v1807
      %v1809 = vrcp.pop %v1800
      %v1810 = vmul.f32 1.0, %v1809
      %v1811 = vrcp.pop %v1801
      %v1812 = vmul.f32 1.0, %v1811
      %v1813 = vrcp.pop %v1802
      %v1814 = vmul.f32 1.0, %v1813
      %v1815 = vrcp.pop %v1803
      %v1816 = vmul.f32 1.0, %v1815
      %v1817 = vrcp.pop %v1804
      %v1818 = vmul.f32 1.0, %v1817
      %v1819 = vrcp.pop %v1805
      %v1820 = vmul.f32 1.0, %v1819
      %v1821 = vrcp.pop %v1806
      %v1822 = vmul.f32 1.0, %v1821
      %v1823 = vmul.f32 %v1737, %v1808
      %v1824 = vmul.f32 %v1742, %v1810
      %v1825 = vmul.f32 %v1747, %v1812
      %v1826 = vmul.f32 %v1752, %v1814
      %v1827 = vmul.f32 %v1757, %v1816
      %v1828 = vmul.f32 %v1762, %v1818
      %v1829 = vmul.f32 %v1767, %v1820
      %v1830 = vmul.f32 %v1772, %v1822
      %1839 = vrot.lane.b32.xlu0 %v557, 2
      %v1840 = vpop.permute.xlu0 %1839
      %1841 = vrot.lane.b32.xlu0 %v558, 2
      %v1842 = vpop.permute.xlu0 %1841
      %1843 = vrot.lane.b32.xlu0 %v559, 2
      %v1844 = vpop.permute.xlu0 %1843
      %1845 = vrot.lane.b32.xlu0 %v560, 2
      %v1846 = vpop.permute.xlu0 %1845
      %1847 = vrot.lane.b32.xlu0 %v561, 2
      %v1848 = vpop.permute.xlu0 %1847
      %1849 = vrot.lane.b32.xlu0 %v562, 2
      %v1850 = vpop.permute.xlu0 %1849
      %1851 = vrot.lane.b32.xlu0 %v563, 2
      %v1852 = vpop.permute.xlu0 %1851
      %1853 = vrot.lane.b32.xlu0 %v564, 2
      %v1854 = vpop.permute.xlu0 %1853
      %v1863 = vsel %vm1121, %v1823, %v1840
      %v1864 = vsel %vm1121, %v1824, %v1842
      %v1865 = vsel %vm1121, %v1825, %v1844
      %v1866 = vsel %vm1121, %v1826, %v1846
      %v1867 = vsel %vm1121, %v1827, %v1848
      %v1868 = vsel %vm1121, %v1828, %v1850
      %v1869 = vsel %vm1121, %v1829, %v1852
      %v1870 = vsel %vm1121, %v1830, %v1854
      %1871 = vst.msk [vmem:[%s278] sm:$0xff] %vm311, %v1863
      %1872 = vst.msk [vmem:[%s278 + $0x8] sm:$0xff] %vm311, %v1864
      %1873 = vst.msk [vmem:[%s278 + $0x10] sm:$0xff] %vm311, %v1865
      %1874 = vst.msk [vmem:[%s278 + $0x18] sm:$0xff] %vm311, %v1866
      %1875 = vst.msk [vmem:[%s278 + $0x20] sm:$0xff] %vm311, %v1867
      %1876 = vst.msk [vmem:[%s278 + $0x28] sm:$0xff] %vm311, %v1868
      %1877 = vst.msk [vmem:[%s278 + $0x30] sm:$0xff] %vm311, %v1869
      %1878 = vst.msk [vmem:[%s278 + $0x38] sm:$0xff] %vm311, %v1870
      %p1879 = scmp.lt.s32.totalorder %s18, 1
      %s1880 = scalar_select %p1879, %s18, 1
      %s1881 = smul.addr %s1880, 8
      %s1882 = smul.addr %s1881, 8
      %s1883 = scalar_lea.vmem %s7, %s1882
      // Predicated region
      $region49: #{tpu_custom_call.1} parent=47 // pred_check
        %p1884 = pneg %p188
      $region50: #{tpu_custom_call.1} parent=47 // pred_check_branch
        %1886 = sbr.rel (%p1884) target = $region52
      $region51: #{tpu_custom_call.1} parent=47 // pred_region
        _
      $region52: #{tpu_custom_call.1} parent=47 // pred_fallthru
        _
    $region48: #{tpu_custom_call.1} parent=5 // pred_fallthru
      _
    %p1887 = scmp.le.s32.totalorder 2, %s13
    // Predicated region
    $region53: #{tpu_custom_call.1} parent=5 // pred_check
      %p1888 = pneg %p1887
    $region54: #{tpu_custom_call.1} parent=5 // pred_check_branch
      %1890 = sbr.rel (%p1888) target = $region56
    $region55: #{tpu_custom_call.1} parent=5 // pred_region
      %s1891 = ssub.s32 %s13, 2
      // Predicated region
      $region57: #{tpu_custom_call.1} parent=55 // pred_check
        %p1892 = pneg %p194
      $region58: #{tpu_custom_call.1} parent=55 // pred_check_branch
        %1894 = sbr.rel (%p1892) target = $region60
      $region59: #{tpu_custom_call.1} parent=55 // pred_region
        %p1895 = scmp.lt.s32.totalorder %s19, 1
        %s1896 = scalar_select %p1895, %s19, 1
        %s1897 = smul.addr %s1896, 8
        %s1898 = smul.addr %s1897, 8
        %s1899 = scalar_lea.vmem %s7, %s1898
      $region60: #{tpu_custom_call.1} parent=55 // pred_fallthru
        _
    $region56: #{tpu_custom_call.1} parent=5 // pred_fallthru
      _
  $region6: #{tpu_custom_call.1} parent=0 // loop_footer
    %s17 = sadd.s32 1, %s13
  $region7: #{tpu_custom_call.1} parent=0 // loop_footer_branch
    %12 = sbr.rel target = $region3
  $region8: #{tpu_custom_call.1} parent=0 // loop_exit
    _

</llo_original>
